<compile_context>
chip_gen: v5e
topology: v5e:2x2
jax: 0.10.0
libtpu: 0.0.40
codegen_flags: <defaults>
</compile_context>

<pallas_src>
import functools

import jax
import jax.numpy as jnp
from jax.experimental import pallas as pl
from jax.experimental.pallas import tpu as pltpu

DIM = 256        # fusion dim
MULTI = 2        # MutanLayer multi
CLI_DIM = 9      # clinical features
VIS_DIM = 400    # vision-encoder output features
CLI_PAD = 128    # lane-dense padding of clinical input
VIS_PAD = 512    # lane-dense padding of vision features


def _round_up(x, m):
    return (x + m - 1) // m * m


def fusion_kernel(cli_ref, mri_ref, pet_ref,
                  tw1_ref, tb1_ref, tw2_ref, tb2_ref, tw3_ref, tb3_ref,
                  wm_ref, bm_ref, wp_ref, bp_ref,
                  m1w_ref, m1b_ref, m2w_ref, m2b_ref, m3w_ref, m3b_ref,
                  mri_o, pet_o, cli_o, glob_o):
    f32 = jnp.float32

    # --- clinical (table) branch: 3-layer MLP, ReLU after each layer ---
    h = jnp.dot(cli_ref[...], tw1_ref[...], preferred_element_type=f32) + tb1_ref[...]
    h = jnp.maximum(h, 0.0)
    h = jnp.dot(h, tw2_ref[...], preferred_element_type=f32) + tb2_ref[...]
    h = jnp.maximum(h, 0.0)
    cli_f = jnp.maximum(
        jnp.dot(h, tw3_ref[...], preferred_element_type=f32) + tb3_ref[...], 0.0)

    # --- fc_mri / fc_pet: plain linear 400(->512 padded) -> 256 ---
    mri_f = jnp.dot(mri_ref[...], wm_ref[...], preferred_element_type=f32) + bm_ref[...]
    pet_f = jnp.dot(pet_ref[...], wp_ref[...], preferred_element_type=f32) + bp_ref[...]

    # --- MutanLayer(dim=256, multi=2); Dropout(p=0.2) is identity in eval mode ---
    def branch(i):
        x1 = jnp.maximum(
            jnp.dot(mri_f, m1w_ref[i], preferred_element_type=f32) + m1b_ref[i], 0.0)
        x2 = jnp.maximum(
            jnp.dot(pet_f, m2w_ref[i], preferred_element_type=f32) + m2b_ref[i], 0.0)
        x3 = jnp.maximum(
            jnp.dot(cli_f, m3w_ref[i], preferred_element_type=f32) + m3b_ref[i], 0.0)
        return x1 * x2 * x3

    glob = jnp.maximum(branch(0) + branch(1), 0.0)

    # write directly into the output refs (no extra h3-style live range)
    mri_o[...] = mri_f.astype(mri_o.dtype)
    pet_o[...] = pet_f.astype(pet_o.dtype)
    cli_o[...] = cli_f.astype(cli_o.dtype)
    glob_o[...] = glob.astype(glob_o.dtype)


def fusion_forward(cli, mri_feat, pet_feat, params, *, tile_b=256):
    """cli: (B, 9); mri_feat/pet_feat: (B, 400) pre-extracted vision features."""
    B = cli.shape[0]
    dt = cli.dtype

    # --- lane-dense padding of the narrow inputs and matching weight rows ---
    cli_p = jnp.pad(cli, ((0, 0), (0, CLI_PAD - cli.shape[1])))
    mri_p = jnp.pad(mri_feat, ((0, 0), (0, VIS_PAD - mri_feat.shape[1])))
    pet_p = jnp.pad(pet_feat, ((0, 0), (0, VIS_PAD - pet_feat.shape[1])))

    tw1 = jnp.pad(params["tw1"], ((0, CLI_PAD - params["tw1"].shape[0]), (0, 0)))
    wm = jnp.pad(params["fc_mri_w"], ((0, VIS_PAD - params["fc_mri_w"].shape[0]), (0, 0)))
    wp = jnp.pad(params["fc_pet_w"], ((0, VIS_PAD - params["fc_pet_w"].shape[0]), (0, 0)))

    # --- batch tiling: TB <= 256, batch padded to a multiple of TB ---
    TB = min(tile_b, _round_up(B, 8))
    Bp = _round_up(B, TB)
    if Bp != B:
        pad = ((0, Bp - B), (0, 0))
        cli_p = jnp.pad(cli_p, pad)
        mri_p = jnp.pad(mri_p, pad)
        pet_p = jnp.pad(pet_p, pad)

    weights = [
        tw1, params["tb1"], params["tw2"], params["tb2"], params["tw3"], params["tb3"],
        wm, params["fc_mri_b"], wp, params["fc_pet_b"],
        params["m1w"], params["m1b"], params["m2w"], params["m2b"],
        params["m3w"], params["m3b"],
    ]

    def act_spec(width):
        return pl.BlockSpec((TB, width), lambda i: (i, 0))

    def resident(a):
        nd = a.ndim  # constant block index -> weight stays resident in VMEM
        return pl.BlockSpec(a.shape, lambda i, nd=nd: (0,) * nd)

    in_specs = ([act_spec(CLI_PAD), act_spec(VIS_PAD), act_spec(VIS_PAD)]
                + [resident(w) for w in weights])
    out_spec = pl.BlockSpec((TB, DIM), lambda i: (i, 0))
    out_struct = jax.ShapeDtypeStruct((Bp, DIM), dt)

    flops = 2 * B * (CLI_DIM * 64 + 64 * 128 + 128 * DIM
                     + 2 * VIS_DIM * DIM + 3 * MULTI * DIM * DIM)
    bytes_accessed = 4 * (B * (CLI_DIM + 2 * VIS_DIM + 4 * DIM)
                          + sum(int(w.size) for w in weights))

    outs = pl.pallas_call(
        fusion_kernel,
        grid=(Bp // TB,),
        out_shape=(out_struct, out_struct, out_struct, out_struct),
        in_specs=in_specs,
        out_specs=(out_spec, out_spec, out_spec, out_spec),
        compiler_params=pltpu.CompilerParams(
            dimension_semantics=("parallel",)),
        cost_estimate=pl.CostEstimate(flops=flops, transcendentals=0,
                                      bytes_accessed=bytes_accessed),
    )(cli_p, mri_p, pet_p, *weights)

    mri_f, pet_f, cli_f, glob_f = (o[:B] for o in outs)
    return mri_f, pet_f, cli_f, glob_f


def init_params(key):
    """Mimic nn.Linear's U(-1/sqrt(fan_in), +1/sqrt(fan_in)); biases kept (1, fout)."""
    def linear(k, fin, fout):
        kw, kb = jax.random.split(k)
        bound = 1.0 / jnp.sqrt(fin)
        w = jax.random.uniform(kw, (fin, fout), jnp.float32, -bound, bound)
        b = jax.random.uniform(kb, (1, fout), jnp.float32, -bound, bound)
        return w, b

    keys = jax.random.split(key, 11)
    p = {}
    p["tw1"], p["tb1"] = linear(keys[0], CLI_DIM, 64)
    p["tw2"], p["tb2"] = linear(keys[1], 64, 128)
    p["tw3"], p["tb3"] = linear(keys[2], 128, DIM)
    p["fc_mri_w"], p["fc_mri_b"] = linear(keys[3], VIS_DIM, DIM)
    p["fc_pet_w"], p["fc_pet_b"] = linear(keys[4], VIS_DIM, DIM)
    koff = 5
    for name in ("m1", "m2", "m3"):
        ws, bs = [], []
        for _ in range(MULTI):
            w, b = linear(keys[koff], DIM, DIM)
            ws.append(w)
            bs.append(b)
            koff += 1
        p[name + "w"] = jnp.stack(ws)   # (2, 256, 256)
        p[name + "b"] = jnp.stack(bs)   # (2, 1, 256)
    return p


def reference(cli, mri_feat, pet_feat, params):
    dot = functools.partial(jnp.dot, precision=jax.lax.Precision.HIGHEST)
    h = jnp.maximum(dot(cli, params["tw1"]) + params["tb1"], 0.0)
    h = jnp.maximum(dot(h, params["tw2"]) + params["tb2"], 0.0)
    cli_f = jnp.maximum(dot(h, params["tw3"]) + params["tb3"], 0.0)
    mri_f = dot(mri_feat, params["fc_mri_w"]) + params["fc_mri_b"]
    pet_f = dot(pet_feat, params["fc_pet_w"]) + params["fc_pet_b"]
    acc = jnp.zeros_like(mri_f)
    for i in range(MULTI):
        x1 = jnp.maximum(dot(mri_f, params["m1w"][i]) + params["m1b"][i], 0.0)
        x2 = jnp.maximum(dot(pet_f, params["m2w"][i]) + params["m2b"][i], 0.0)
        x3 = jnp.maximum(dot(cli_f, params["m3w"][i]) + params["m3b"][i], 0.0)
        acc = acc + x1 * x2 * x3
    glob = jnp.maximum(acc, 0.0)
    return mri_f, pet_f, cli_f, glob


if __name__ == "__main__":
    key = jax.random.PRNGKey(0)
    kp, k1, k2, k3 = jax.random.split(key, 4)

    B = 8
    cli = jax.random.normal(k1, (B, CLI_DIM), jnp.float32)
    # pre-extracted vision features (the 3-D CNN encoders are out of scope, see TODO above)
    mri_feat = jax.random.normal(k2, (B, VIS_DIM), jnp.float32)
    pet_feat = jax.random.normal(k3, (B, VIS_DIM), jnp.float32)
    params = init_params(kp)

    outs = fusion_forward(cli, mri_feat, pet_feat, params)
    outs = jax.block_until_ready(outs)
    refs = reference(cli, mri_feat, pet_feat, params)

    names = ["mri_feature", "pet_feature", "cli_feature", "global_feature"]
    for name, o, r in zip(names, outs, refs):
        assert o.shape == (B, DIM), f"{name} shape {o.shape}"
        assert jnp.allclose(o, r, atol=2e-3, rtol=2e-3), f"{name} mismatch vs reference"

    print("KERNEL_OK")
</pallas_src>

<mosaic_0001>
module attributes {stable_mosaic.version = 11 : i64} {
  func.func @fusion_kernel(%arg0: i32, %arg1: memref<8x128xf32, #tpu.memory_space<vmem>>, %arg2: memref<8x512xf32, #tpu.memory_space<vmem>>, %arg3: memref<8x512xf32, #tpu.memory_space<vmem>>, %arg4: memref<128x64xf32, #tpu.memory_space<vmem>>, %arg5: memref<1x64xf32, #tpu.memory_space<vmem>>, %arg6: memref<64x128xf32, #tpu.memory_space<vmem>>, %arg7: memref<1x128xf32, #tpu.memory_space<vmem>>, %arg8: memref<128x256xf32, #tpu.memory_space<vmem>>, %arg9: memref<1x256xf32, #tpu.memory_space<vmem>>, %arg10: memref<512x256xf32, #tpu.memory_space<vmem>>, %arg11: memref<1x256xf32, #tpu.memory_space<vmem>>, %arg12: memref<512x256xf32, #tpu.memory_space<vmem>>, %arg13: memref<1x256xf32, #tpu.memory_space<vmem>>, %arg14: memref<2x256x256xf32, #tpu.memory_space<vmem>>, %arg15: memref<2x1x256xf32, #tpu.memory_space<vmem>>, %arg16: memref<2x256x256xf32, #tpu.memory_space<vmem>>, %arg17: memref<2x1x256xf32, #tpu.memory_space<vmem>>, %arg18: memref<2x256x256xf32, #tpu.memory_space<vmem>>, %arg19: memref<2x1x256xf32, #tpu.memory_space<vmem>>, %arg20: memref<8x256xf32, #tpu.memory_space<vmem>>, %arg21: memref<8x256xf32, #tpu.memory_space<vmem>>, %arg22: memref<8x256xf32, #tpu.memory_space<vmem>>, %arg23: memref<8x256xf32, #tpu.memory_space<vmem>>) attributes {dimension_semantics = [#tpu.dimension_semantics<parallel>], iteration_bounds = array<i64: 1>, scalar_prefetch = 0 : i64, scratch_operands = 0 : i64, tpu.core_type = #tpu.core_type<tc>, window_params = [{transform_indices = @transform_0, window_bounds = array<i64: 8, 128>}, {transform_indices = @transform_1, window_bounds = array<i64: 8, 512>}, {transform_indices = @transform_2, window_bounds = array<i64: 8, 512>}, {pipeline_mode = #tpu.pipeline_mode<synchronous>, transform_indices = @transform_3, window_bounds = array<i64: 128, 64>}, {pipeline_mode = #tpu.pipeline_mode<synchronous>, transform_indices = @transform_4, window_bounds = array<i64: 1, 64>}, {pipeline_mode = #tpu.pipeline_mode<synchronous>, transform_indices = @transform_5, window_bounds = array<i64: 64, 128>}, {pipeline_mode = #tpu.pipeline_mode<synchronous>, transform_indices = @transform_6, window_bounds = array<i64: 1, 128>}, {pipeline_mode = #tpu.pipeline_mode<synchronous>, transform_indices = @transform_7, window_bounds = array<i64: 128, 256>}, {pipeline_mode = #tpu.pipeline_mode<synchronous>, transform_indices = @transform_8, window_bounds = array<i64: 1, 256>}, {pipeline_mode = #tpu.pipeline_mode<synchronous>, transform_indices = @transform_9, window_bounds = array<i64: 512, 256>}, {pipeline_mode = #tpu.pipeline_mode<synchronous>, transform_indices = @transform_10, window_bounds = array<i64: 1, 256>}, {pipeline_mode = #tpu.pipeline_mode<synchronous>, transform_indices = @transform_11, window_bounds = array<i64: 512, 256>}, {pipeline_mode = #tpu.pipeline_mode<synchronous>, transform_indices = @transform_12, window_bounds = array<i64: 1, 256>}, {pipeline_mode = #tpu.pipeline_mode<synchronous>, transform_indices = @transform_13, window_bounds = array<i64: 2, 256, 256>}, {pipeline_mode = #tpu.pipeline_mode<synchronous>, transform_indices = @transform_14, window_bounds = array<i64: 2, 1, 256>}, {pipeline_mode = #tpu.pipeline_mode<synchronous>, transform_indices = @transform_15, window_bounds = array<i64: 2, 256, 256>}, {pipeline_mode = #tpu.pipeline_mode<synchronous>, transform_indices = @transform_16, window_bounds = array<i64: 2, 1, 256>}, {pipeline_mode = #tpu.pipeline_mode<synchronous>, transform_indices = @transform_17, window_bounds = array<i64: 2, 256, 256>}, {pipeline_mode = #tpu.pipeline_mode<synchronous>, transform_indices = @transform_18, window_bounds = array<i64: 2, 1, 256>}, {transform_indices = @transform_19, window_bounds = array<i64: 8, 256>}, {transform_indices = @transform_20, window_bounds = array<i64: 8, 256>}, {transform_indices = @transform_21, window_bounds = array<i64: 8, 256>}, {transform_indices = @transform_22, window_bounds = array<i64: 8, 256>}]} {
    %c0 = arith.constant 0 : index
    %c0_0 = arith.constant 0 : index
    %0 = vector.load %arg1[%c0, %c0_0] : memref<8x128xf32, #tpu.memory_space<vmem>>, vector<8x128xf32>
    %c0_1 = arith.constant 0 : index
    %c0_2 = arith.constant 0 : index
    %1 = vector.load %arg4[%c0_1, %c0_2] : memref<128x64xf32, #tpu.memory_space<vmem>>, vector<128x64xf32>
    %cst = arith.constant dense<0.000000e+00> : vector<8x64xf32>
    %2 = tpu.matmul %0, %1, %cst {dimension_numbers = #tpu.dot_dimension_numbers<[1], [0], [0], [1], [0, 0, 1, 1], [], []>} : vector<8x128xf32>, vector<128x64xf32>, vector<8x64xf32> -> vector<8x64xf32>
    %c0_3 = arith.constant 0 : index
    %c0_4 = arith.constant 0 : index
    %3 = vector.load %arg5[%c0_3, %c0_4] : memref<1x64xf32, #tpu.memory_space<vmem>>, vector<1x64xf32>
    %4 = vector.broadcast %3 : vector<1x64xf32> to vector<8x64xf32>
    %5 = arith.addf %2, %4 : vector<8x64xf32>
    %cst_5 = arith.constant 0.000000e+00 : f32
    %6 = vector.broadcast %cst_5 : f32 to vector<8x64xf32>
    %7 = arith.maximumf %5, %6 : vector<8x64xf32>
    %c0_6 = arith.constant 0 : index
    %c0_7 = arith.constant 0 : index
    %8 = vector.load %arg6[%c0_6, %c0_7] : memref<64x128xf32, #tpu.memory_space<vmem>>, vector<64x128xf32>
    %cst_8 = arith.constant dense<0.000000e+00> : vector<8x128xf32>
    %9 = tpu.matmul %7, %8, %cst_8 {dimension_numbers = #tpu.dot_dimension_numbers<[1], [0], [0], [1], [0, 0, 1, 1], [], []>} : vector<8x64xf32>, vector<64x128xf32>, vector<8x128xf32> -> vector<8x128xf32>
    %c0_9 = arith.constant 0 : index
    %c0_10 = arith.constant 0 : index
    %10 = vector.load %arg7[%c0_9, %c0_10] : memref<1x128xf32, #tpu.memory_space<vmem>>, vector<1x128xf32>
    %11 = vector.broadcast %10 : vector<1x128xf32> to vector<8x128xf32>
    %12 = arith.addf %9, %11 : vector<8x128xf32>
    %cst_11 = arith.constant 0.000000e+00 : f32
    %13 = vector.broadcast %cst_11 : f32 to vector<8x128xf32>
    %14 = arith.maximumf %12, %13 : vector<8x128xf32>
    %c0_12 = arith.constant 0 : index
    %c0_13 = arith.constant 0 : index
    %15 = vector.load %arg8[%c0_12, %c0_13] : memref<128x256xf32, #tpu.memory_space<vmem>>, vector<128x256xf32>
    %cst_14 = arith.constant dense<0.000000e+00> : vector<8x256xf32>
    %16 = tpu.matmul %14, %15, %cst_14 {dimension_numbers = #tpu.dot_dimension_numbers<[1], [0], [0], [1], [0, 0, 1, 1], [], []>} : vector<8x128xf32>, vector<128x256xf32>, vector<8x256xf32> -> vector<8x256xf32>
    %c0_15 = arith.constant 0 : index
    %c0_16 = arith.constant 0 : index
    %17 = vector.load %arg9[%c0_15, %c0_16] : memref<1x256xf32, #tpu.memory_space<vmem>>, vector<1x256xf32>
    %18 = vector.broadcast %17 : vector<1x256xf32> to vector<8x256xf32>
    %19 = arith.addf %16, %18 : vector<8x256xf32>
    %cst_17 = arith.constant 0.000000e+00 : f32
    %20 = vector.broadcast %cst_17 : f32 to vector<8x256xf32>
    %21 = arith.maximumf %19, %20 : vector<8x256xf32>
    %c0_18 = arith.constant 0 : index
    %c0_19 = arith.constant 0 : index
    %22 = vector.load %arg2[%c0_18, %c0_19] : memref<8x512xf32, #tpu.memory_space<vmem>>, vector<8x512xf32>
    %c0_20 = arith.constant 0 : index
    %c0_21 = arith.constant 0 : index
    %23 = vector.load %arg10[%c0_20, %c0_21] : memref<512x256xf32, #tpu.memory_space<vmem>>, vector<512x256xf32>
    %cst_22 = arith.constant dense<0.000000e+00> : vector<8x256xf32>
    %24 = tpu.matmul %22, %23, %cst_22 {dimension_numbers = #tpu.dot_dimension_numbers<[1], [0], [0], [1], [0, 0, 1, 1], [], []>} : vector<8x512xf32>, vector<512x256xf32>, vector<8x256xf32> -> vector<8x256xf32>
    %c0_23 = arith.constant 0 : index
    %c0_24 = arith.constant 0 : index
    %25 = vector.load %arg11[%c0_23, %c0_24] : memref<1x256xf32, #tpu.memory_space<vmem>>, vector<1x256xf32>
    %26 = vector.broadcast %25 : vector<1x256xf32> to vector<8x256xf32>
    %27 = arith.addf %24, %26 : vector<8x256xf32>
    %c0_25 = arith.constant 0 : index
    %c0_26 = arith.constant 0 : index
    %28 = vector.load %arg3[%c0_25, %c0_26] : memref<8x512xf32, #tpu.memory_space<vmem>>, vector<8x512xf32>
    %c0_27 = arith.constant 0 : index
    %c0_28 = arith.constant 0 : index
    %29 = vector.load %arg12[%c0_27, %c0_28] : memref<512x256xf32, #tpu.memory_space<vmem>>, vector<512x256xf32>
    %cst_29 = arith.constant dense<0.000000e+00> : vector<8x256xf32>
    %30 = tpu.matmul %28, %29, %cst_29 {dimension_numbers = #tpu.dot_dimension_numbers<[1], [0], [0], [1], [0, 0, 1, 1], [], []>} : vector<8x512xf32>, vector<512x256xf32>, vector<8x256xf32> -> vector<8x256xf32>
    %c0_30 = arith.constant 0 : index
    %c0_31 = arith.constant 0 : index
    %31 = vector.load %arg13[%c0_30, %c0_31] : memref<1x256xf32, #tpu.memory_space<vmem>>, vector<1x256xf32>
    %32 = vector.broadcast %31 : vector<1x256xf32> to vector<8x256xf32>
    %33 = arith.addf %30, %32 : vector<8x256xf32>
    %c0_32 = arith.constant 0 : index
    %c0_33 = arith.constant 0 : index
    %c0_34 = arith.constant 0 : index
    %34 = vector.load %arg14[%c0_32, %c0_33, %c0_34] : memref<2x256x256xf32, #tpu.memory_space<vmem>>, vector<1x256x256xf32>
    %35 = vector.shape_cast %34 : vector<1x256x256xf32> to vector<256x256xf32>
    %cst_35 = arith.constant dense<0.000000e+00> : vector<8x256xf32>
    %36 = tpu.matmul %27, %35, %cst_35 {dimension_numbers = #tpu.dot_dimension_numbers<[1], [0], [0], [1], [0, 0, 1, 1], [], []>} : vector<8x256xf32>, vector<256x256xf32>, vector<8x256xf32> -> vector<8x256xf32>
    %c0_36 = arith.constant 0 : index
    %c0_37 = arith.constant 0 : index
    %c0_38 = arith.constant 0 : index
    %37 = vector.load %arg15[%c0_36, %c0_37, %c0_38] : memref<2x1x256xf32, #tpu.memory_space<vmem>>, vector<1x1x256xf32>
    %38 = vector.shape_cast %37 : vector<1x1x256xf32> to vector<1x256xf32>
    %39 = vector.broadcast %38 : vector<1x256xf32> to vector<8x256xf32>
    %40 = arith.addf %36, %39 : vector<8x256xf32>
    %cst_39 = arith.constant 0.000000e+00 : f32
    %41 = vector.broadcast %cst_39 : f32 to vector<8x256xf32>
    %42 = arith.maximumf %40, %41 : vector<8x256xf32>
    %c0_40 = arith.constant 0 : index
    %c0_41 = arith.constant 0 : index
    %c0_42 = arith.constant 0 : index
    %43 = vector.load %arg16[%c0_40, %c0_41, %c0_42] : memref<2x256x256xf32, #tpu.memory_space<vmem>>, vector<1x256x256xf32>
    %44 = vector.shape_cast %43 : vector<1x256x256xf32> to vector<256x256xf32>
    %cst_43 = arith.constant dense<0.000000e+00> : vector<8x256xf32>
    %45 = tpu.matmul %33, %44, %cst_43 {dimension_numbers = #tpu.dot_dimension_numbers<[1], [0], [0], [1], [0, 0, 1, 1], [], []>} : vector<8x256xf32>, vector<256x256xf32>, vector<8x256xf32> -> vector<8x256xf32>
    %c0_44 = arith.constant 0 : index
    %c0_45 = arith.constant 0 : index
    %c0_46 = arith.constant 0 : index
    %46 = vector.load %arg17[%c0_44, %c0_45, %c0_46] : memref<2x1x256xf32, #tpu.memory_space<vmem>>, vector<1x1x256xf32>
    %47 = vector.shape_cast %46 : vector<1x1x256xf32> to vector<1x256xf32>
    %48 = vector.broadcast %47 : vector<1x256xf32> to vector<8x256xf32>
    %49 = arith.addf %45, %48 : vector<8x256xf32>
    %cst_47 = arith.constant 0.000000e+00 : f32
    %50 = vector.broadcast %cst_47 : f32 to vector<8x256xf32>
    %51 = arith.maximumf %49, %50 : vector<8x256xf32>
    %c0_48 = arith.constant 0 : index
    %c0_49 = arith.constant 0 : index
    %c0_50 = arith.constant 0 : index
    %52 = vector.load %arg18[%c0_48, %c0_49, %c0_50] : memref<2x256x256xf32, #tpu.memory_space<vmem>>, vector<1x256x256xf32>
    %53 = vector.shape_cast %52 : vector<1x256x256xf32> to vector<256x256xf32>
    %cst_51 = arith.constant dense<0.000000e+00> : vector<8x256xf32>
    %54 = tpu.matmul %21, %53, %cst_51 {dimension_numbers = #tpu.dot_dimension_numbers<[1], [0], [0], [1], [0, 0, 1, 1], [], []>} : vector<8x256xf32>, vector<256x256xf32>, vector<8x256xf32> -> vector<8x256xf32>
    %c0_52 = arith.constant 0 : index
    %c0_53 = arith.constant 0 : index
    %c0_54 = arith.constant 0 : index
    %55 = vector.load %arg19[%c0_52, %c0_53, %c0_54] : memref<2x1x256xf32, #tpu.memory_space<vmem>>, vector<1x1x256xf32>
    %56 = vector.shape_cast %55 : vector<1x1x256xf32> to vector<1x256xf32>
    %57 = vector.broadcast %56 : vector<1x256xf32> to vector<8x256xf32>
    %58 = arith.addf %54, %57 : vector<8x256xf32>
    %cst_55 = arith.constant 0.000000e+00 : f32
    %59 = vector.broadcast %cst_55 : f32 to vector<8x256xf32>
    %60 = arith.maximumf %58, %59 : vector<8x256xf32>
    %61 = arith.mulf %42, %51 : vector<8x256xf32>
    %62 = arith.mulf %61, %60 : vector<8x256xf32>
    %c1 = arith.constant 1 : index
    %c0_56 = arith.constant 0 : index
    %c0_57 = arith.constant 0 : index
    %63 = vector.load %arg14[%c1, %c0_56, %c0_57] : memref<2x256x256xf32, #tpu.memory_space<vmem>>, vector<1x256x256xf32>
    %64 = vector.shape_cast %63 : vector<1x256x256xf32> to vector<256x256xf32>
    %cst_58 = arith.constant dense<0.000000e+00> : vector<8x256xf32>
    %65 = tpu.matmul %27, %64, %cst_58 {dimension_numbers = #tpu.dot_dimension_numbers<[1], [0], [0], [1], [0, 0, 1, 1], [], []>} : vector<8x256xf32>, vector<256x256xf32>, vector<8x256xf32> -> vector<8x256xf32>
    %c1_59 = arith.constant 1 : index
    %c0_60 = arith.constant 0 : index
    %c0_61 = arith.constant 0 : index
    %66 = vector.load %arg15[%c1_59, %c0_60, %c0_61] : memref<2x1x256xf32, #tpu.memory_space<vmem>>, vector<1x1x256xf32>
    %67 = vector.shape_cast %66 : vector<1x1x256xf32> to vector<1x256xf32>
    %68 = vector.broadcast %67 : vector<1x256xf32> to vector<8x256xf32>
    %69 = arith.addf %65, %68 : vector<8x256xf32>
    %cst_62 = arith.constant 0.000000e+00 : f32
    %70 = vector.broadcast %cst_62 : f32 to vector<8x256xf32>
    %71 = arith.maximumf %69, %70 : vector<8x256xf32>
    %c1_63 = arith.constant 1 : index
    %c0_64 = arith.constant 0 : index
    %c0_65 = arith.constant 0 : index
    %72 = vector.load %arg16[%c1_63, %c0_64, %c0_65] : memref<2x256x256xf32, #tpu.memory_space<vmem>>, vector<1x256x256xf32>
    %73 = vector.shape_cast %72 : vector<1x256x256xf32> to vector<256x256xf32>
    %cst_66 = arith.constant dense<0.000000e+00> : vector<8x256xf32>
    %74 = tpu.matmul %33, %73, %cst_66 {dimension_numbers = #tpu.dot_dimension_numbers<[1], [0], [0], [1], [0, 0, 1, 1], [], []>} : vector<8x256xf32>, vector<256x256xf32>, vector<8x256xf32> -> vector<8x256xf32>
    %c1_67 = arith.constant 1 : index
    %c0_68 = arith.constant 0 : index
    %c0_69 = arith.constant 0 : index
    %75 = vector.load %arg17[%c1_67, %c0_68, %c0_69] : memref<2x1x256xf32, #tpu.memory_space<vmem>>, vector<1x1x256xf32>
    %76 = vector.shape_cast %75 : vector<1x1x256xf32> to vector<1x256xf32>
    %77 = vector.broadcast %76 : vector<1x256xf32> to vector<8x256xf32>
    %78 = arith.addf %74, %77 : vector<8x256xf32>
    %cst_70 = arith.constant 0.000000e+00 : f32
    %79 = vector.broadcast %cst_70 : f32 to vector<8x256xf32>
    %80 = arith.maximumf %78, %79 : vector<8x256xf32>
    %c1_71 = arith.constant 1 : index
    %c0_72 = arith.constant 0 : index
    %c0_73 = arith.constant 0 : index
    %81 = vector.load %arg18[%c1_71, %c0_72, %c0_73] : memref<2x256x256xf32, #tpu.memory_space<vmem>>, vector<1x256x256xf32>
    %82 = vector.shape_cast %81 : vector<1x256x256xf32> to vector<256x256xf32>
    %cst_74 = arith.constant dense<0.000000e+00> : vector<8x256xf32>
    %83 = tpu.matmul %21, %82, %cst_74 {dimension_numbers = #tpu.dot_dimension_numbers<[1], [0], [0], [1], [0, 0, 1, 1], [], []>} : vector<8x256xf32>, vector<256x256xf32>, vector<8x256xf32> -> vector<8x256xf32>
    %c1_75 = arith.constant 1 : index
    %c0_76 = arith.constant 0 : index
    %c0_77 = arith.constant 0 : index
    %84 = vector.load %arg19[%c1_75, %c0_76, %c0_77] : memref<2x1x256xf32, #tpu.memory_space<vmem>>, vector<1x1x256xf32>
    %85 = vector.shape_cast %84 : vector<1x1x256xf32> to vector<1x256xf32>
    %86 = vector.broadcast %85 : vector<1x256xf32> to vector<8x256xf32>
    %87 = arith.addf %83, %86 : vector<8x256xf32>
    %cst_78 = arith.constant 0.000000e+00 : f32
    %88 = vector.broadcast %cst_78 : f32 to vector<8x256xf32>
    %89 = arith.maximumf %87, %88 : vector<8x256xf32>
    %90 = arith.mulf %71, %80 : vector<8x256xf32>
    %91 = arith.mulf %90, %89 : vector<8x256xf32>
    %92 = arith.addf %62, %91 : vector<8x256xf32>
    %cst_79 = arith.constant 0.000000e+00 : f32
    %93 = vector.broadcast %cst_79 : f32 to vector<8x256xf32>
    %94 = arith.maximumf %92, %93 : vector<8x256xf32>
    %c0_80 = arith.constant 0 : index
    %c0_81 = arith.constant 0 : index
    %95 = vector.load %arg20[%c0_80, %c0_81] : memref<8x256xf32, #tpu.memory_space<vmem>>, vector<8x256xf32>
    tpu.vector_store %arg20[%c0_80, %c0_81], %27 {strides = array<i32>} : memref<8x256xf32, #tpu.memory_space<vmem>>, vector<8x256xf32>,
    %c0_82 = arith.constant 0 : index
    %c0_83 = arith.constant 0 : index
    %96 = vector.load %arg21[%c0_82, %c0_83] : memref<8x256xf32, #tpu.memory_space<vmem>>, vector<8x256xf32>
    tpu.vector_store %arg21[%c0_82, %c0_83], %33 {strides = array<i32>} : memref<8x256xf32, #tpu.memory_space<vmem>>, vector<8x256xf32>,
    %c0_84 = arith.constant 0 : index
    %c0_85 = arith.constant 0 : index
    %97 = vector.load %arg22[%c0_84, %c0_85] : memref<8x256xf32, #tpu.memory_space<vmem>>, vector<8x256xf32>
    tpu.vector_store %arg22[%c0_84, %c0_85], %21 {strides = array<i32>} : memref<8x256xf32, #tpu.memory_space<vmem>>, vector<8x256xf32>,
    %c0_86 = arith.constant 0 : index
    %c0_87 = arith.constant 0 : index
    %98 = vector.load %arg23[%c0_86, %c0_87] : memref<8x256xf32, #tpu.memory_space<vmem>>, vector<8x256xf32>
    tpu.vector_store %arg23[%c0_86, %c0_87], %94 {strides = array<i32>} : memref<8x256xf32, #tpu.memory_space<vmem>>, vector<8x256xf32>,
    return
  }
  func.func @transform_0(%arg0: i32) -> (i32, i32) {
    %c0_i32 = arith.constant 0 : i32
    %c0_i32_0 = arith.constant 0 : i32
    return %arg0, %c0_i32 : i32, i32
  }
  func.func @transform_1(%arg0: i32) -> (i32, i32) {
    %c0_i32 = arith.constant 0 : i32
    %c0_i32_0 = arith.constant 0 : i32
    return %arg0, %c0_i32 : i32, i32
  }
  func.func @transform_2(%arg0: i32) -> (i32, i32) {
    %c0_i32 = arith.constant 0 : i32
    %c0_i32_0 = arith.constant 0 : i32
    return %arg0, %c0_i32 : i32, i32
  }
  func.func @transform_3(%arg0: i32) -> (i32, i32) {
    %c0_i32 = arith.constant 0 : i32
    %c0_i32_0 = arith.constant 0 : i32
    %c0_i32_1 = arith.constant 0 : i32
    return %c0_i32, %c0_i32_0 : i32, i32
  }
  func.func @transform_4(%arg0: i32) -> (i32, i32) {
    %c0_i32 = arith.constant 0 : i32
    %c0_i32_0 = arith.constant 0 : i32
    %c0_i32_1 = arith.constant 0 : i32
    return %c0_i32, %c0_i32_0 : i32, i32
  }
  func.func @transform_5(%arg0: i32) -> (i32, i32) {
    %c0_i32 = arith.constant 0 : i32
    %c0_i32_0 = arith.constant 0 : i32
    %c0_i32_1 = arith.constant 0 : i32
    return %c0_i32, %c0_i32_0 : i32, i32
  }
  func.func @transform_6(%arg0: i32) -> (i32, i32) {
    %c0_i32 = arith.constant 0 : i32
    %c0_i32_0 = arith.constant 0 : i32
    %c0_i32_1 = arith.constant 0 : i32
    return %c0_i32, %c0_i32_0 : i32, i32
  }
  func.func @transform_7(%arg0: i32) -> (i32, i32) {
    %c0_i32 = arith.constant 0 : i32
    %c0_i32_0 = arith.constant 0 : i32
    %c0_i32_1 = arith.constant 0 : i32
    return %c0_i32, %c0_i32_0 : i32, i32
  }
  func.func @transform_8(%arg0: i32) -> (i32, i32) {
    %c0_i32 = arith.constant 0 : i32
    %c0_i32_0 = arith.constant 0 : i32
    %c0_i32_1 = arith.constant 0 : i32
    return %c0_i32, %c0_i32_0 : i32, i32
  }
  func.func @transform_9(%arg0: i32) -> (i32, i32) {
    %c0_i32 = arith.constant 0 : i32
    %c0_i32_0 = arith.constant 0 : i32
    %c0_i32_1 = arith.constant 0 : i32
    return %c0_i32, %c0_i32_0 : i32, i32
  }
  func.func @transform_10(%arg0: i32) -> (i32, i32) {
    %c0_i32 = arith.constant 0 : i32
    %c0_i32_0 = arith.constant 0 : i32
    %c0_i32_1 = arith.constant 0 : i32
    return %c0_i32, %c0_i32_0 : i32, i32
  }
  func.func @transform_11(%arg0: i32) -> (i32, i32) {
    %c0_i32 = arith.constant 0 : i32
    %c0_i32_0 = arith.constant 0 : i32
    %c0_i32_1 = arith.constant 0 : i32
    return %c0_i32, %c0_i32_0 : i32, i32
  }
  func.func @transform_12(%arg0: i32) -> (i32, i32) {
    %c0_i32 = arith.constant 0 : i32
    %c0_i32_0 = arith.constant 0 : i32
    %c0_i32_1 = arith.constant 0 : i32
    return %c0_i32, %c0_i32_0 : i32, i32
  }
  func.func @transform_13(%arg0: i32) -> (i32, i32, i32) {
    %c0_i32 = arith.constant 0 : i32
    %c0_i32_0 = arith.constant 0 : i32
    %c0_i32_1 = arith.constant 0 : i32
    %c0_i32_2 = arith.constant 0 : i32
    return %c0_i32, %c0_i32_0, %c0_i32_1 : i32, i32, i32
  }
  func.func @transform_14(%arg0: i32) -> (i32, i32, i32) {
    %c0_i32 = arith.constant 0 : i32
    %c0_i32_0 = arith.constant 0 : i32
    %c0_i32_1 = arith.constant 0 : i32
    %c0_i32_2 = arith.constant 0 : i32
    return %c0_i32, %c0_i32_0, %c0_i32_1 : i32, i32, i32
  }
  func.func @transform_15(%arg0: i32) -> (i32, i32, i32) {
    %c0_i32 = arith.constant 0 : i32
    %c0_i32_0 = arith.constant 0 : i32
    %c0_i32_1 = arith.constant 0 : i32
    %c0_i32_2 = arith.constant 0 : i32
    return %c0_i32, %c0_i32_0, %c0_i32_1 : i32, i32, i32
  }
  func.func @transform_16(%arg0: i32) -> (i32, i32, i32) {
    %c0_i32 = arith.constant 0 : i32
    %c0_i32_0 = arith.constant 0 : i32
    %c0_i32_1 = arith.constant 0 : i32
    %c0_i32_2 = arith.constant 0 : i32
    return %c0_i32, %c0_i32_0, %c0_i32_1 : i32, i32, i32
  }
  func.func @transform_17(%arg0: i32) -> (i32, i32, i32) {
    %c0_i32 = arith.constant 0 : i32
    %c0_i32_0 = arith.constant 0 : i32
    %c0_i32_1 = arith.constant 0 : i32
    %c0_i32_2 = arith.constant 0 : i32
    return %c0_i32, %c0_i32_0, %c0_i32_1 : i32, i32, i32
  }
  func.func @transform_18(%arg0: i32) -> (i32, i32, i32) {
    %c0_i32 = arith.constant 0 : i32
    %c0_i32_0 = arith.constant 0 : i32
    %c0_i32_1 = arith.constant 0 : i32
    %c0_i32_2 = arith.constant 0 : i32
    return %c0_i32, %c0_i32_0, %c0_i32_1 : i32, i32, i32
  }
  func.func @transform_19(%arg0: i32) -> (i32, i32) {
    %c0_i32 = arith.constant 0 : i32
    %c0_i32_0 = arith.constant 0 : i32
    return %arg0, %c0_i32 : i32, i32
  }
  func.func @transform_20(%arg0: i32) -> (i32, i32) {
    %c0_i32 = arith.constant 0 : i32
    %c0_i32_0 = arith.constant 0 : i32
    return %arg0, %c0_i32 : i32, i32
  }
  func.func @transform_21(%arg0: i32) -> (i32, i32) {
    %c0_i32 = arith.constant 0 : i32
    %c0_i32_0 = arith.constant 0 : i32
    return %arg0, %c0_i32 : i32, i32
  }
  func.func @transform_22(%arg0: i32) -> (i32, i32) {
    %c0_i32 = arith.constant 0 : i32
    %c0_i32_0 = arith.constant 0 : i32
    return %arg0, %c0_i32 : i32, i32
  }
}

</mosaic_0001>

<llo_original>
// kernel: tpu_custom_call.1
$region0: #{tpu_custom_call.1}
  #allocation0 [shape = 'u32[]', space=smem, size = 0x4, offset = 0x4, fixed_abs, tag = 'smem constant byte address 0x4 - core index']
  #allocation1 [shape = 'u32[72,128]{1,0:T(1,128)}', space=vmem, size = 0x9000, scoped, tag = 'internal scratch']
  %s0 = inlined_call_operand.vmem [shape: f32[8,128], index: 0, kind: input, shape index: {}]
  %s1 = inlined_call_operand.vmem [shape: f32[8,512], index: 1, kind: input, shape index: {}]
  %s2 = inlined_call_operand.vmem [shape: f32[8,512], index: 2, kind: input, shape index: {}]
  %s3 = inlined_call_operand.vmem [shape: f32[128,64], index: 3, kind: input, shape index: {}]
  %s4 = inlined_call_operand.vmem [shape: f32[1,64], index: 4, kind: input, shape index: {}]
  %s5 = inlined_call_operand.vmem [shape: f32[64,128], index: 5, kind: input, shape index: {}]
  %s6 = inlined_call_operand.vmem [shape: f32[1,128], index: 6, kind: input, shape index: {}]
  %s7 = inlined_call_operand.hbm [shape: f32[128,256], index: 7, kind: input, shape index: {}]
  %s8 = inlined_call_operand.vmem [shape: f32[1,256], index: 8, kind: input, shape index: {}]
  %s9 = inlined_call_operand.hbm [shape: f32[512,256], index: 9, kind: input, shape index: {}]
  %s10 = inlined_call_operand.vmem [shape: f32[1,256], index: 10, kind: input, shape index: {}]
  %s11 = inlined_call_operand.hbm [shape: f32[512,256], index: 11, kind: input, shape index: {}]
  %s12 = inlined_call_operand.vmem [shape: f32[1,256], index: 12, kind: input, shape index: {}]
  %s13 = inlined_call_operand.hbm [shape: f32[2,256,256], index: 13, kind: input, shape index: {}]
  %s14 = inlined_call_operand.vmem [shape: f32[2,1,256], index: 14, kind: input, shape index: {}]
  %s15 = inlined_call_operand.hbm [shape: f32[2,256,256], index: 15, kind: input, shape index: {}]
  %s16 = inlined_call_operand.vmem [shape: f32[2,1,256], index: 16, kind: input, shape index: {}]
  %s17 = inlined_call_operand.hbm [shape: f32[2,256,256], index: 17, kind: input, shape index: {}]
  %s18 = inlined_call_operand.vmem [shape: f32[2,1,256], index: 18, kind: input, shape index: {}]
  %s19 = inlined_call_operand.hbm [shape: f32[8,256], index: 19, kind: output, shape index: {0}]
  %s20 = inlined_call_operand.hbm [shape: f32[8,256], index: 20, kind: output, shape index: {1}]
  %s21 = inlined_call_operand.hbm [shape: f32[8,256], index: 21, kind: output, shape index: {2}]
  %s22 = inlined_call_operand.hbm [shape: f32[8,256], index: 22, kind: output, shape index: {3}]
  %23 = xla_tuple %s19, %s20, %s21, %s22
  %s24 = sld [smem:[#allocation0]]
  $region134: #{tpu_custom_call.1} parent=0
    _
  %s26 = ssub.s32 1, %s24
  %s27 = scalar_select 0, %s26, %s24
  $region1: #{tpu_custom_call.1} parent=0
    #allocation2 [shape = 'u8[131072]{0}', space=vmem, size = 0x20000, scoped, tag = 'input window, operand 7, single buffered']
    #allocation3 [shape = 's32[1]{0}', space=sflag, size = 0x4, scoped, tag = 'scoped memory for tpu_custom_call.1']
    #allocation4 [shape = 's32[1]{0}', space=sflag, size = 0x4, scoped, tag = 'scoped memory for tpu_custom_call.1']
    #allocation5 [shape = 'u8[524288]{0}', space=vmem, size = 0x80000, scoped, tag = 'input window, operand 9, single buffered']
    #allocation6 [shape = 's32[1]{0}', space=sflag, size = 0x4, scoped, tag = 'scoped memory for tpu_custom_call.1']
    #allocation7 [shape = 'u8[524288]{0}', space=vmem, size = 0x80000, scoped, tag = 'input window, operand 11, single buffered']
    #allocation8 [shape = 'u8[524288]{0}', space=vmem, size = 0x80000, scoped, tag = 'input window, operand 13, single buffered']
    #allocation9 [shape = 's32[1]{0}', space=sflag, size = 0x4, scoped, tag = 'scoped memory for tpu_custom_call.1']
    #allocation10 [shape = 'u8[524288]{0}', space=vmem, size = 0x80000, scoped, tag = 'input window, operand 15, single buffered']
    #allocation11 [shape = 'u8[524288]{0}', space=vmem, size = 0x80000, scoped, tag = 'input window, operand 17, single buffered']
    #allocation12 [shape = 's32[1]{0}', space=sflag, size = 0x4, scoped, tag = 'scoped memory for tpu_custom_call.1']
    #allocation13 [shape = 'u8[8192]{0}', space=vmem, size = 0x2000, scoped, tag = 'output window, operand 0, single buffered']
    #allocation14 [shape = 'u8[8192]{0}', space=vmem, size = 0x2000, scoped, tag = 'output window, operand 1, single buffered']
    #allocation15 [shape = 's32[1]{0}', space=sflag, size = 0x4, scoped, tag = 'scoped memory for tpu_custom_call.1']
    #allocation16 [shape = 'u8[8192]{0}', space=vmem, size = 0x2000, scoped, tag = 'output window, operand 2, single buffered']
    #allocation17 [shape = 'u8[8192]{0}', space=vmem, size = 0x2000, scoped, tag = 'output window, operand 3, single buffered']
    #allocation18 [shape = 's32[1]{0}', space=sflag, size = 0x4, scoped, tag = 'scoped memory for tpu_custom_call.1']
    %28 = vsyncpa [#allocation3], 0
    %29 = vsyncpa [#allocation6], 0
    %30 = vsyncpa [#allocation9], 0
    %31 = vsyncpa [#allocation12], 0
    %32 = vsyncpa [#allocation4], 0
    %33 = vsyncpa [#allocation15], 0
    %34 = vsyncpa [#allocation18], 0
    // Predicated region
    $region2: #{tpu_custom_call.1} parent=1 // pred_check
      _
    $region3: #{tpu_custom_call.1} parent=1 // pred_check_branch
      %36 = sbr.rel (0) target = $region5
    $region4: #{tpu_custom_call.1} parent=1 // pred_region
      _
    $region5: #{tpu_custom_call.1} parent=1 // pred_fallthru
      _
    // Predicated region
    $region6: #{tpu_custom_call.1} parent=1 // pred_check
      _
    $region7: #{tpu_custom_call.1} parent=1 // pred_check_branch
      %38 = sbr.rel (0) target = $region9
    $region8: #{tpu_custom_call.1} parent=1 // pred_region
      _
    $region9: #{tpu_custom_call.1} parent=1 // pred_fallthru
      _
    // Predicated region
    $region10: #{tpu_custom_call.1} parent=1 // pred_check
      _
    $region11: #{tpu_custom_call.1} parent=1 // pred_check_branch
      %40 = sbr.rel (0) target = $region13
    $region12: #{tpu_custom_call.1} parent=1 // pred_region
      _
    $region13: #{tpu_custom_call.1} parent=1 // pred_fallthru
      _
    // Predicated region
    $region14: #{tpu_custom_call.1} parent=1 // pred_check
      _
    $region15: #{tpu_custom_call.1} parent=1 // pred_check_branch
      %42 = sbr.rel (0) target = $region17
    $region16: #{tpu_custom_call.1} parent=1 // pred_region
      _
    $region17: #{tpu_custom_call.1} parent=1 // pred_fallthru
      _
    // Predicated region
    $region18: #{tpu_custom_call.1} parent=1 // pred_check
      _
    $region19: #{tpu_custom_call.1} parent=1 // pred_check_branch
      %44 = sbr.rel (0) target = $region21
    $region20: #{tpu_custom_call.1} parent=1 // pred_region
      _
    $region21: #{tpu_custom_call.1} parent=1 // pred_fallthru
      _
    // Predicated region
    $region22: #{tpu_custom_call.1} parent=1 // pred_check
      _
    $region23: #{tpu_custom_call.1} parent=1 // pred_check_branch
      %46 = sbr.rel (0) target = $region25
    $region24: #{tpu_custom_call.1} parent=1 // pred_region
      _
    $region25: #{tpu_custom_call.1} parent=1 // pred_fallthru
      _
    // Predicated region
    $region26: #{tpu_custom_call.1} parent=1 // pred_check
      _
    $region27: #{tpu_custom_call.1} parent=1 // pred_check_branch
      %48 = sbr.rel (0) target = $region29
    $region28: #{tpu_custom_call.1} parent=1 // pred_region
      _
    $region29: #{tpu_custom_call.1} parent=1 // pred_fallthru
      _
    // Predicated region
    $region30: #{tpu_custom_call.1} parent=1 // pred_check
      _
    $region31: #{tpu_custom_call.1} parent=1 // pred_check_branch
      %50 = sbr.rel (0) target = $region33
    $region32: #{tpu_custom_call.1} parent=1 // pred_region
      %52 = vsyncadd [#allocation3], 0
      %s53 = sshll.u32 %s7, 4
      %s54 = int_to_ptr.hbm [resolvable:$true] %s53
      %s55 = sshll.u32 [#allocation2], 4
      %s56 = int_to_ptr.vmem [resolvable:$true] %s55
      %61 = dma.hbm_to_vmem [thread:$0]  %s54, 4096, %s56, [#allocation3], 256, 256, 16
    $region33: #{tpu_custom_call.1} parent=1 // pred_fallthru
      _
    // Predicated region
    $region34: #{tpu_custom_call.1} parent=1 // pred_check
      _
    $region35: #{tpu_custom_call.1} parent=1 // pred_check_branch
      %63 = sbr.rel (0) target = $region37
    $region36: #{tpu_custom_call.1} parent=1 // pred_region
      _
    $region37: #{tpu_custom_call.1} parent=1 // pred_fallthru
      _
    // Predicated region
    $region38: #{tpu_custom_call.1} parent=1 // pred_check
      _
    $region39: #{tpu_custom_call.1} parent=1 // pred_check_branch
      %65 = sbr.rel (0) target = $region41
    $region40: #{tpu_custom_call.1} parent=1 // pred_region
      %67 = vsyncadd [#allocation6], 0
      %s68 = sshll.u32 %s9, 4
      %s69 = int_to_ptr.hbm [resolvable:$true] %s68
      %s70 = sshll.u32 [#allocation5], 4
      %s71 = int_to_ptr.vmem [resolvable:$true] %s70
      %76 = dma.hbm_to_vmem [thread:$0]  %s69, 16384, %s71, [#allocation6], 256, 256, 16
    $region41: #{tpu_custom_call.1} parent=1 // pred_fallthru
      _
    // Predicated region
    $region42: #{tpu_custom_call.1} parent=1 // pred_check
      _
    $region43: #{tpu_custom_call.1} parent=1 // pred_check_branch
      %78 = sbr.rel (0) target = $region45
    $region44: #{tpu_custom_call.1} parent=1 // pred_region
      _
    $region45: #{tpu_custom_call.1} parent=1 // pred_fallthru
      _
    // Predicated region
    $region46: #{tpu_custom_call.1} parent=1 // pred_check
      _
    $region47: #{tpu_custom_call.1} parent=1 // pred_check_branch
      %80 = sbr.rel (0) target = $region49
    $region48: #{tpu_custom_call.1} parent=1 // pred_region
      %82 = vsyncadd [#allocation6], 0
      %s83 = sshll.u32 %s11, 4
      %s84 = int_to_ptr.hbm [resolvable:$true] %s83
      %s85 = sshll.u32 [#allocation7], 4
      %s86 = int_to_ptr.vmem [resolvable:$true] %s85
      %91 = dma.hbm_to_vmem [thread:$0]  %s84, 16384, %s86, [#allocation6], 256, 256, 16
    $region49: #{tpu_custom_call.1} parent=1 // pred_fallthru
      _
    // Predicated region
    $region50: #{tpu_custom_call.1} parent=1 // pred_check
      _
    $region51: #{tpu_custom_call.1} parent=1 // pred_check_branch
      %93 = sbr.rel (0) target = $region53
    $region52: #{tpu_custom_call.1} parent=1 // pred_region
      _
    $region53: #{tpu_custom_call.1} parent=1 // pred_fallthru
      _
    // Predicated region
    $region54: #{tpu_custom_call.1} parent=1 // pred_check
      _
    $region55: #{tpu_custom_call.1} parent=1 // pred_check_branch
      %95 = sbr.rel (0) target = $region57
    $region56: #{tpu_custom_call.1} parent=1 // pred_region
      %97 = vsyncadd [#allocation9], 0
      %s98 = sshll.u32 %s13, 4
      %s99 = int_to_ptr.hbm [resolvable:$true] %s98
      %s100 = sshll.u32 [#allocation8], 4
      %s101 = int_to_ptr.vmem [resolvable:$true] %s100
      %106 = dma.hbm_to_vmem [thread:$0]  %s99, 16384, %s101, [#allocation9], 256, 256, 16
    $region57: #{tpu_custom_call.1} parent=1 // pred_fallthru
      _
    // Predicated region
    $region58: #{tpu_custom_call.1} parent=1 // pred_check
      _
    $region59: #{tpu_custom_call.1} parent=1 // pred_check_branch
      %108 = sbr.rel (0) target = $region61
    $region60: #{tpu_custom_call.1} parent=1 // pred_region
      _
    $region61: #{tpu_custom_call.1} parent=1 // pred_fallthru
      _
    // Predicated region
    $region62: #{tpu_custom_call.1} parent=1 // pred_check
      _
    $region63: #{tpu_custom_call.1} parent=1 // pred_check_branch
      %110 = sbr.rel (0) target = $region65
    $region64: #{tpu_custom_call.1} parent=1 // pred_region
      %112 = vsyncadd [#allocation9], 0
      %s113 = sshll.u32 %s15, 4
      %s114 = int_to_ptr.hbm [resolvable:$true] %s113
      %s115 = sshll.u32 [#allocation10], 4
      %s116 = int_to_ptr.vmem [resolvable:$true] %s115
      %121 = dma.hbm_to_vmem [thread:$0]  %s114, 16384, %s116, [#allocation9], 256, 256, 16
    $region65: #{tpu_custom_call.1} parent=1 // pred_fallthru
      _
    // Predicated region
    $region66: #{tpu_custom_call.1} parent=1 // pred_check
      _
    $region67: #{tpu_custom_call.1} parent=1 // pred_check_branch
      %123 = sbr.rel (0) target = $region69
    $region68: #{tpu_custom_call.1} parent=1 // pred_region
      _
    $region69: #{tpu_custom_call.1} parent=1 // pred_fallthru
      _
    // Predicated region
    $region70: #{tpu_custom_call.1} parent=1 // pred_check
      _
    $region71: #{tpu_custom_call.1} parent=1 // pred_check_branch
      %125 = sbr.rel (0) target = $region73
    $region72: #{tpu_custom_call.1} parent=1 // pred_region
      %127 = vsyncadd [#allocation12], 0
      %s128 = sshll.u32 %s17, 4
      %s129 = int_to_ptr.hbm [resolvable:$true] %s128
      %s130 = sshll.u32 [#allocation11], 4
      %s131 = int_to_ptr.vmem [resolvable:$true] %s130
      %136 = dma.hbm_to_vmem [thread:$0]  %s129, 16384, %s131, [#allocation12], 256, 256, 16
    $region73: #{tpu_custom_call.1} parent=1 // pred_fallthru
      _
    // Predicated region
    $region74: #{tpu_custom_call.1} parent=1 // pred_check
      _
    $region75: #{tpu_custom_call.1} parent=1 // pred_check_branch
      %138 = sbr.rel (0) target = $region77
    $region76: #{tpu_custom_call.1} parent=1 // pred_region
      _
    $region77: #{tpu_custom_call.1} parent=1 // pred_fallthru
      _
    // Predicated region
    $region78: #{tpu_custom_call.1} parent=1 // pred_check
      _
    $region79: #{tpu_custom_call.1} parent=1 // pred_check_branch
      %140 = sbr.rel (0) target = $region81
    $region80: #{tpu_custom_call.1} parent=1 // pred_region
      %142 = dma.done [#allocation3], 4096
    $region81: #{tpu_custom_call.1} parent=1 // pred_fallthru
      _
    // Predicated region
    $region82: #{tpu_custom_call.1} parent=1 // pred_check
      _
    $region83: #{tpu_custom_call.1} parent=1 // pred_check_branch
      %144 = sbr.rel (0) target = $region85
    $region84: #{tpu_custom_call.1} parent=1 // pred_region
      %146 = dma.done [#allocation6], 16384
    $region85: #{tpu_custom_call.1} parent=1 // pred_fallthru
      _
    // Predicated region
    $region86: #{tpu_custom_call.1} parent=1 // pred_check
      _
    $region87: #{tpu_custom_call.1} parent=1 // pred_check_branch
      %148 = sbr.rel (0) target = $region89
    $region88: #{tpu_custom_call.1} parent=1 // pred_region
      %150 = dma.done [#allocation6], 16384
    $region89: #{tpu_custom_call.1} parent=1 // pred_fallthru
      _
    // Predicated region
    $region90: #{tpu_custom_call.1} parent=1 // pred_check
      _
    $region91: #{tpu_custom_call.1} parent=1 // pred_check_branch
      %152 = sbr.rel (0) target = $region93
    $region92: #{tpu_custom_call.1} parent=1 // pred_region
      %154 = dma.done [#allocation9], 16384
    $region93: #{tpu_custom_call.1} parent=1 // pred_fallthru
      _
    // Predicated region
    $region94: #{tpu_custom_call.1} parent=1 // pred_check
      _
    $region95: #{tpu_custom_call.1} parent=1 // pred_check_branch
      %156 = sbr.rel (0) target = $region97
    $region96: #{tpu_custom_call.1} parent=1 // pred_region
      %158 = dma.done [#allocation9], 16384
    $region97: #{tpu_custom_call.1} parent=1 // pred_fallthru
      _
    // Predicated region
    $region98: #{tpu_custom_call.1} parent=1 // pred_check
      _
    $region99: #{tpu_custom_call.1} parent=1 // pred_check_branch
      %160 = sbr.rel (0) target = $region101
    $region100: #{tpu_custom_call.1} parent=1 // pred_region
      %162 = dma.done [#allocation12], 16384
    $region101: #{tpu_custom_call.1} parent=1 // pred_fallthru
      _
    %v163 = vld [vmem:[%s0] sm:$0xff]
    %v164 = vld [vmem:[%s3] sm:$0xff]
    %v165 = vld [vmem:[%s3 + $0x8] sm:$0xff]
    %v166 = vld [vmem:[%s3 + $0x10] sm:$0xff]
    %v167 = vld [vmem:[%s3 + $0x18] sm:$0xff]
    %v168 = vld [vmem:[%s3 + $0x20] sm:$0xff]
    %v169 = vld [vmem:[%s3 + $0x28] sm:$0xff]
    %v170 = vld [vmem:[%s3 + $0x30] sm:$0xff]
    %v171 = vld [vmem:[%s3 + $0x38] sm:$0xff]
    %v172 = vld [vmem:[%s3 + $0x40] sm:$0xff]
    %v173 = vld [vmem:[%s3 + $0x48] sm:$0xff]
    %v174 = vld [vmem:[%s3 + $0x50] sm:$0xff]
    %v175 = vld [vmem:[%s3 + $0x58] sm:$0xff]
    %v176 = vld [vmem:[%s3 + $0x60] sm:$0xff]
    %v177 = vld [vmem:[%s3 + $0x68] sm:$0xff]
    %v178 = vld [vmem:[%s3 + $0x70] sm:$0xff]
    %v179 = vld [vmem:[%s3 + $0x78] sm:$0xff]
    %v180 = vld [vmem:[%s4] sm:$0x1]
    %v182 = vperm.slane %v180, 0
    %184 = vmatpush.msra.mxu0 %v179
    %185 = vmatpush.msra.mxu0 %v178
    %186 = vmatpush.msra.mxu0 %v177
    %187 = vmatpush.msra.mxu0 %v176
    %188 = vmatpush.msra.mxu0 %v175
    %189 = vmatpush.msra.mxu0 %v174
    %190 = vmatpush.msra.mxu0 %v173
    %191 = vmatpush.msra.mxu0 %v172
    %192 = vmatpush.msra.mxu0 %v171
    %193 = vmatpush.msra.mxu0 %v170
    %194 = vmatpush.msra.mxu0 %v169
    %195 = vmatpush.msra.mxu0 %v168
    %196 = vmatpush.msra.mxu0 %v167
    %197 = vmatpush.msra.mxu0 %v166
    %198 = vmatpush.msra.mxu0 %v165
    %199 = vmatpush.msra.mxu0 %v164
    %200 = vmatmul.f32.gmra.mxu0 %v163
    %v201 = vpop.f32.mrf.mxu0
    %v202 = vadd.f32 %v182, %v201
    %203 = vdwg.mxu0
    %v204 = vmax.f32 %v202, 0.0
    %v205 = vld [vmem:[%s5] sm:$0xff]
    %v206 = vld [vmem:[%s5 + $0x8] sm:$0xff]
    %v207 = vld [vmem:[%s5 + $0x10] sm:$0xff]
    %v208 = vld [vmem:[%s5 + $0x18] sm:$0xff]
    %v209 = vld [vmem:[%s5 + $0x20] sm:$0xff]
    %v210 = vld [vmem:[%s5 + $0x28] sm:$0xff]
    %v211 = vld [vmem:[%s5 + $0x30] sm:$0xff]
    %v212 = vld [vmem:[%s5 + $0x38] sm:$0xff]
    %v213 = vld [vmem:[%s6] sm:$0x1]
    %v215 = vperm.slane %v213, 0
    %vm217 = vcmask 523264
    %v219 = vsel %vm217, %v204, 0
    %221 = vmatpush.msra.mxu0 0.0
    %222 = vmatpush.msra.mxu0 0.0
    %223 = vmatpush.msra.mxu0 0.0
    %224 = vmatpush.msra.mxu0 0.0
    %225 = vmatpush.msra.mxu0 0.0
    %226 = vmatpush.msra.mxu0 0.0
    %227 = vmatpush.msra.mxu0 0.0
    %228 = vmatpush.msra.mxu0 0.0
    %229 = vmatpush.msra.mxu0 %v212
    %230 = vmatpush.msra.mxu0 %v211
    %231 = vmatpush.msra.mxu0 %v210
    %232 = vmatpush.msra.mxu0 %v209
    %233 = vmatpush.msra.mxu0 %v208
    %234 = vmatpush.msra.mxu0 %v207
    %235 = vmatpush.msra.mxu0 %v206
    %236 = vmatpush.msra.mxu0 %v205
    %237 = vmatmul.f32.gmra.mxu0 %v219
    %v238 = vpop.f32.mrf.mxu0
    %v239 = vadd.f32 %v215, %v238
    %240 = vdwg.mxu0
    %v241 = vmax.f32 %v239, 0.0
    %v242 = vld [vmem:[#allocation2] sm:$0xff]
    %v243 = vld [vmem:[#allocation2 + $0x8] sm:$0xff]
    %v244 = vld [vmem:[#allocation2 + $0x10] sm:$0xff]
    %v245 = vld [vmem:[#allocation2 + $0x18] sm:$0xff]
    %v246 = vld [vmem:[#allocation2 + $0x20] sm:$0xff]
    %v247 = vld [vmem:[#allocation2 + $0x28] sm:$0xff]
    %v248 = vld [vmem:[#allocation2 + $0x30] sm:$0xff]
    %v249 = vld [vmem:[#allocation2 + $0x38] sm:$0xff]
    %v250 = vld [vmem:[#allocation2 + $0x40] sm:$0xff]
    %v251 = vld [vmem:[#allocation2 + $0x48] sm:$0xff]
    %v252 = vld [vmem:[#allocation2 + $0x50] sm:$0xff]
    %v253 = vld [vmem:[#allocation2 + $0x58] sm:$0xff]
    %v254 = vld [vmem:[#allocation2 + $0x60] sm:$0xff]
    %v255 = vld [vmem:[#allocation2 + $0x68] sm:$0xff]
    %v256 = vld [vmem:[#allocation2 + $0x70] sm:$0xff]
    %v257 = vld [vmem:[#allocation2 + $0x78] sm:$0xff]
    %v258 = vld [vmem:[#allocation2 + $0x80] sm:$0xff]
    %v259 = vld [vmem:[#allocation2 + $0x88] sm:$0xff]
    %v260 = vld [vmem:[#allocation2 + $0x90] sm:$0xff]
    %v261 = vld [vmem:[#allocation2 + $0x98] sm:$0xff]
    %v262 = vld [vmem:[#allocation2 + $0xa0] sm:$0xff]
    %v263 = vld [vmem:[#allocation2 + $0xa8] sm:$0xff]
    %v264 = vld [vmem:[#allocation2 + $0xb0] sm:$0xff]
    %v265 = vld [vmem:[#allocation2 + $0xb8] sm:$0xff]
    %v266 = vld [vmem:[#allocation2 + $0xc0] sm:$0xff]
    %v267 = vld [vmem:[#allocation2 + $0xc8] sm:$0xff]
    %v268 = vld [vmem:[#allocation2 + $0xd0] sm:$0xff]
    %v269 = vld [vmem:[#allocation2 + $0xd8] sm:$0xff]
    %v270 = vld [vmem:[#allocation2 + $0xe0] sm:$0xff]
    %v271 = vld [vmem:[#allocation2 + $0xe8] sm:$0xff]
    %v272 = vld [vmem:[#allocation2 + $0xf0] sm:$0xff]
    %v273 = vld [vmem:[#allocation2 + $0xf8] sm:$0xff]
    %v274 = vld [vmem:[%s8] sm:$0x3]
    %v276 = vperm.slane %v274, 0
    %v277 = vperm.slane %v274, 1
    %280 = vmatpush.msra.mxu0 %v272
    %281 = vmatpush.msra.mxu0 %v270
    %282 = vmatpush.msra.mxu0 %v268
    %283 = vmatpush.msra.mxu0 %v266
    %284 = vmatpush.msra.mxu0 %v264
    %285 = vmatpush.msra.mxu0 %v262
    %286 = vmatpush.msra.mxu0 %v260
    %287 = vmatpush.msra.mxu0 %v258
    %288 = vmatpush.msra.mxu0 %v256
    %289 = vmatpush.msra.mxu0 %v254
    %290 = vmatpush.msra.mxu0 %v252
    %291 = vmatpush.msra.mxu0 %v250
    %292 = vmatpush.msra.mxu0 %v248
    %293 = vmatpush.msra.mxu0 %v246
    %294 = vmatpush.msra.mxu0 %v244
    %295 = vmatpush.msra.mxu0 %v242
    %296 = vmatmul.f32.gmra.mxu0 %v241
    %v297 = vpop.f32.mrf.mxu0
    %v298 = vadd.f32 %v276, %v297
    %299 = vdwg.mxu0
    %300 = vmatpush.msra.mxu0 %v273
    %301 = vmatpush.msra.mxu0 %v271
    %302 = vmatpush.msra.mxu0 %v269
    %303 = vmatpush.msra.mxu0 %v267
    %304 = vmatpush.msra.mxu0 %v265
    %305 = vmatpush.msra.mxu0 %v263
    %306 = vmatpush.msra.mxu0 %v261
    %307 = vmatpush.msra.mxu0 %v259
    %308 = vmatpush.msra.mxu0 %v257
    %309 = vmatpush.msra.mxu0 %v255
    %310 = vmatpush.msra.mxu0 %v253
    %311 = vmatpush.msra.mxu0 %v251
    %312 = vmatpush.msra.mxu0 %v249
    %313 = vmatpush.msra.mxu0 %v247
    %314 = vmatpush.msra.mxu0 %v245
    %315 = vmatpush.msra.mxu0 %v243
    %316 = vmatmul.f32.gmra.mxu0 %v241
    %v317 = vpop.f32.mrf.mxu0
    %v318 = vadd.f32 %v277, %v317
    %319 = vdwg.mxu0
    %v320 = vmax.f32 %v298, 0.0
    %v321 = vmax.f32 %v318, 0.0
    %v322 = vld [vmem:[%s1] sm:$0xff]
    %v323 = vld [vmem:[%s1 + $0x8] sm:$0xff]
    %v324 = vld [vmem:[%s1 + $0x10] sm:$0xff]
    %v325 = vld [vmem:[%s1 + $0x18] sm:$0xff]
    %v326 = vld [vmem:[#allocation5] sm:$0xff]
    %v327 = vld [vmem:[#allocation5 + $0x8] sm:$0xff]
    %v328 = vld [vmem:[#allocation5 + $0x10] sm:$0xff]
    %v329 = vld [vmem:[#allocation5 + $0x18] sm:$0xff]
    %v330 = vld [vmem:[#allocation5 + $0x20] sm:$0xff]
    %v331 = vld [vmem:[#allocation5 + $0x28] sm:$0xff]
    %v332 = vld [vmem:[#allocation5 + $0x30] sm:$0xff]
    %v333 = vld [vmem:[#allocation5 + $0x38] sm:$0xff]
    %v334 = vld [vmem:[#allocation5 + $0x40] sm:$0xff]
    %v335 = vld [vmem:[#allocation5 + $0x48] sm:$0xff]
    %v336 = vld [vmem:[#allocation5 + $0x50] sm:$0xff]
    %v337 = vld [vmem:[#allocation5 + $0x58] sm:$0xff]
    %v338 = vld [vmem:[#allocation5 + $0x60] sm:$0xff]
    %v339 = vld [vmem:[#allocation5 + $0x68] sm:$0xff]
    %v340 = vld [vmem:[#allocation5 + $0x70] sm:$0xff]
    %v341 = vld [vmem:[#allocation5 + $0x78] sm:$0xff]
    %v342 = vld [vmem:[#allocation5 + $0x80] sm:$0xff]
    %v343 = vld [vmem:[#allocation5 + $0x88] sm:$0xff]
    %v344 = vld [vmem:[#allocation5 + $0x90] sm:$0xff]
    %v345 = vld [vmem:[#allocation5 + $0x98] sm:$0xff]
    %v346 = vld [vmem:[#allocation5 + $0xa0] sm:$0xff]
    %v347 = vld [vmem:[#allocation5 + $0xa8] sm:$0xff]
    %v348 = vld [vmem:[#allocation5 + $0xb0] sm:$0xff]
    %v349 = vld [vmem:[#allocation5 + $0xb8] sm:$0xff]
    %v350 = vld [vmem:[#allocation5 + $0xc0] sm:$0xff]
    %v351 = vld [vmem:[#allocation5 + $0xc8] sm:$0xff]
    %v352 = vld [vmem:[#allocation5 + $0xd0] sm:$0xff]
    %v353 = vld [vmem:[#allocation5 + $0xd8] sm:$0xff]
    %v354 = vld [vmem:[#allocation5 + $0xe0] sm:$0xff]
    %v355 = vld [vmem:[#allocation5 + $0xe8] sm:$0xff]
    %v356 = vld [vmem:[#allocation5 + $0xf0] sm:$0xff]
    %v357 = vld [vmem:[#allocation5 + $0xf8] sm:$0xff]
    %v358 = vld [vmem:[#allocation5 + $0x100] sm:$0xff]
    %v359 = vld [vmem:[#allocation5 + $0x108] sm:$0xff]
    %v360 = vld [vmem:[#allocation5 + $0x110] sm:$0xff]
    %v361 = vld [vmem:[#allocation5 + $0x118] sm:$0xff]
    %v362 = vld [vmem:[#allocation5 + $0x120] sm:$0xff]
    %v363 = vld [vmem:[#allocation5 + $0x128] sm:$0xff]
    %v364 = vld [vmem:[#allocation5 + $0x130] sm:$0xff]
    %v365 = vld [vmem:[#allocation5 + $0x138] sm:$0xff]
    %v366 = vld [vmem:[#allocation5 + $0x140] sm:$0xff]
    %v367 = vld [vmem:[#allocation5 + $0x148] sm:$0xff]
    %v368 = vld [vmem:[#allocation5 + $0x150] sm:$0xff]
    %v369 = vld [vmem:[#allocation5 + $0x158] sm:$0xff]
    %v370 = vld [vmem:[#allocation5 + $0x160] sm:$0xff]
    %v371 = vld [vmem:[#allocation5 + $0x168] sm:$0xff]
    %v372 = vld [vmem:[#allocation5 + $0x170] sm:$0xff]
    %v373 = vld [vmem:[#allocation5 + $0x178] sm:$0xff]
    %v374 = vld [vmem:[#allocation5 + $0x180] sm:$0xff]
    %v375 = vld [vmem:[#allocation5 + $0x188] sm:$0xff]
    %v376 = vld [vmem:[#allocation5 + $0x190] sm:$0xff]
    %v377 = vld [vmem:[#allocation5 + $0x198] sm:$0xff]
    %v378 = vld [vmem:[#allocation5 + $0x1a0] sm:$0xff]
    %v379 = vld [vmem:[#allocation5 + $0x1a8] sm:$0xff]
    %v380 = vld [vmem:[#allocation5 + $0x1b0] sm:$0xff]
    %v381 = vld [vmem:[#allocation5 + $0x1b8] sm:$0xff]
    %v382 = vld [vmem:[#allocation5 + $0x1c0] sm:$0xff]
    %v383 = vld [vmem:[#allocation5 + $0x1c8] sm:$0xff]
    %v384 = vld [vmem:[#allocation5 + $0x1d0] sm:$0xff]
    %v385 = vld [vmem:[#allocation5 + $0x1d8] sm:$0xff]
    %v386 = vld [vmem:[#allocation5 + $0x1e0] sm:$0xff]
    %v387 = vld [vmem:[#allocation5 + $0x1e8] sm:$0xff]
    %v388 = vld [vmem:[#allocation5 + $0x1f0] sm:$0xff]
    %v389 = vld [vmem:[#allocation5 + $0x1f8] sm:$0xff]
    %v390 = vld [vmem:[#allocation5 + $0x200] sm:$0xff]
    %v391 = vld [vmem:[#allocation5 + $0x208] sm:$0xff]
    %v392 = vld [vmem:[#allocation5 + $0x210] sm:$0xff]
    %v393 = vld [vmem:[#allocation5 + $0x218] sm:$0xff]
    %v394 = vld [vmem:[#allocation5 + $0x220] sm:$0xff]
    %v395 = vld [vmem:[#allocation5 + $0x228] sm:$0xff]
    %v396 = vld [vmem:[#allocation5 + $0x230] sm:$0xff]
    %v397 = vld [vmem:[#allocation5 + $0x238] sm:$0xff]
    %v398 = vld [vmem:[#allocation5 + $0x240] sm:$0xff]
    %v399 = vld [vmem:[#allocation5 + $0x248] sm:$0xff]
    %v400 = vld [vmem:[#allocation5 + $0x250] sm:$0xff]
    %v401 = vld [vmem:[#allocation5 + $0x258] sm:$0xff]
    %v402 = vld [vmem:[#allocation5 + $0x260] sm:$0xff]
    %v403 = vld [vmem:[#allocation5 + $0x268] sm:$0xff]
    %v404 = vld [vmem:[#allocation5 + $0x270] sm:$0xff]
    %v405 = vld [vmem:[#allocation5 + $0x278] sm:$0xff]
    %v406 = vld [vmem:[#allocation5 + $0x280] sm:$0xff]
    %v407 = vld [vmem:[#allocation5 + $0x288] sm:$0xff]
    %v408 = vld [vmem:[#allocation5 + $0x290] sm:$0xff]
    %v409 = vld [vmem:[#allocation5 + $0x298] sm:$0xff]
    %v410 = vld [vmem:[#allocation5 + $0x2a0] sm:$0xff]
    %v411 = vld [vmem:[#allocation5 + $0x2a8] sm:$0xff]
    %v412 = vld [vmem:[#allocation5 + $0x2b0] sm:$0xff]
    %v413 = vld [vmem:[#allocation5 + $0x2b8] sm:$0xff]
    %v414 = vld [vmem:[#allocation5 + $0x2c0] sm:$0xff]
    %v415 = vld [vmem:[#allocation5 + $0x2c8] sm:$0xff]
    %v416 = vld [vmem:[#allocation5 + $0x2d0] sm:$0xff]
    %v417 = vld [vmem:[#allocation5 + $0x2d8] sm:$0xff]
    %v418 = vld [vmem:[#allocation5 + $0x2e0] sm:$0xff]
    %v419 = vld [vmem:[#allocation5 + $0x2e8] sm:$0xff]
    %v420 = vld [vmem:[#allocation5 + $0x2f0] sm:$0xff]
    %v421 = vld [vmem:[#allocation5 + $0x2f8] sm:$0xff]
    %v422 = vld [vmem:[#allocation5 + $0x300] sm:$0xff]
    %v423 = vld [vmem:[#allocation5 + $0x308] sm:$0xff]
    %v424 = vld [vmem:[#allocation5 + $0x310] sm:$0xff]
    %v425 = vld [vmem:[#allocation5 + $0x318] sm:$0xff]
    %v426 = vld [vmem:[#allocation5 + $0x320] sm:$0xff]
    %v427 = vld [vmem:[#allocation5 + $0x328] sm:$0xff]
    %v428 = vld [vmem:[#allocation5 + $0x330] sm:$0xff]
    %v429 = vld [vmem:[#allocation5 + $0x338] sm:$0xff]
    %v430 = vld [vmem:[#allocation5 + $0x340] sm:$0xff]
    %v431 = vld [vmem:[#allocation5 + $0x348] sm:$0xff]
    %v432 = vld [vmem:[#allocation5 + $0x350] sm:$0xff]
    %v433 = vld [vmem:[#allocation5 + $0x358] sm:$0xff]
    %v434 = vld [vmem:[#allocation5 + $0x360] sm:$0xff]
    %v435 = vld [vmem:[#allocation5 + $0x368] sm:$0xff]
    %v436 = vld [vmem:[#allocation5 + $0x370] sm:$0xff]
    %v437 = vld [vmem:[#allocation5 + $0x378] sm:$0xff]
    %v438 = vld [vmem:[#allocation5 + $0x380] sm:$0xff]
    %v439 = vld [vmem:[#allocation5 + $0x388] sm:$0xff]
    %v440 = vld [vmem:[#allocation5 + $0x390] sm:$0xff]
    %v441 = vld [vmem:[#allocation5 + $0x398] sm:$0xff]
    %v442 = vld [vmem:[#allocation5 + $0x3a0] sm:$0xff]
    %v443 = vld [vmem:[#allocation5 + $0x3a8] sm:$0xff]
    %v444 = vld [vmem:[#allocation5 + $0x3b0] sm:$0xff]
    %v445 = vld [vmem:[#allocation5 + $0x3b8] sm:$0xff]
    %v446 = vld [vmem:[#allocation5 + $0x3c0] sm:$0xff]
    %v447 = vld [vmem:[#allocation5 + $0x3c8] sm:$0xff]
    %v448 = vld [vmem:[#allocation5 + $0x3d0] sm:$0xff]
    %v449 = vld [vmem:[#allocation5 + $0x3d8] sm:$0xff]
    %v450 = vld [vmem:[#allocation5 + $0x3e0] sm:$0xff]
    %v451 = vld [vmem:[#allocation5 + $0x3e8] sm:$0xff]
    %v452 = vld [vmem:[#allocation5 + $0x3f0] sm:$0xff]
    %v453 = vld [vmem:[#allocation5 + $0x3f8] sm:$0xff]
    %v454 = vld [vmem:[%s10] sm:$0x3]
    %v456 = vperm.slane %v454, 0
    %v457 = vperm.slane %v454, 1
    %460 = vmatpush.msra.mxu0 %v356
    %461 = vmatpush.msra.mxu0 %v354
    %462 = vmatpush.msra.mxu0 %v352
    %463 = vmatpush.msra.mxu0 %v350
    %464 = vmatpush.msra.mxu0 %v348
    %465 = vmatpush.msra.mxu0 %v346
    %466 = vmatpush.msra.mxu0 %v344
    %467 = vmatpush.msra.mxu0 %v342
    %468 = vmatpush.msra.mxu0 %v340
    %469 = vmatpush.msra.mxu0 %v338
    %470 = vmatpush.msra.mxu0 %v336
    %471 = vmatpush.msra.mxu0 %v334
    %472 = vmatpush.msra.mxu0 %v332
    %473 = vmatpush.msra.mxu0 %v330
    %474 = vmatpush.msra.mxu0 %v328
    %475 = vmatpush.msra.mxu0 %v326
    %476 = vmatmul.f32.gmra.mxu0 %v322
    %v477 = vpop.f32.mrf.mxu0
    %v478 = vadd.f32 %v456, %v477
    %479 = vdwg.mxu0
    %480 = vmatpush.msra.mxu0 %v388
    %481 = vmatpush.msra.mxu0 %v386
    %482 = vmatpush.msra.mxu0 %v384
    %483 = vmatpush.msra.mxu0 %v382
    %484 = vmatpush.msra.mxu0 %v380
    %485 = vmatpush.msra.mxu0 %v378
    %486 = vmatpush.msra.mxu0 %v376
    %487 = vmatpush.msra.mxu0 %v374
    %488 = vmatpush.msra.mxu0 %v372
    %489 = vmatpush.msra.mxu0 %v370
    %490 = vmatpush.msra.mxu0 %v368
    %491 = vmatpush.msra.mxu0 %v366
    %492 = vmatpush.msra.mxu0 %v364
    %493 = vmatpush.msra.mxu0 %v362
    %494 = vmatpush.msra.mxu0 %v360
    %495 = vmatpush.msra.mxu0 %v358
    %496 = vmatmul.f32.gmra.mxu0 %v323
    %v497 = vpop.f32.mrf.mxu0
    %v498 = vadd.f32 %v478, %v497
    %499 = vdwg.mxu0
    %500 = vmatpush.msra.mxu0 %v420
    %501 = vmatpush.msra.mxu0 %v418
    %502 = vmatpush.msra.mxu0 %v416
    %503 = vmatpush.msra.mxu0 %v414
    %504 = vmatpush.msra.mxu0 %v412
    %505 = vmatpush.msra.mxu0 %v410
    %506 = vmatpush.msra.mxu0 %v408
    %507 = vmatpush.msra.mxu0 %v406
    %508 = vmatpush.msra.mxu0 %v404
    %509 = vmatpush.msra.mxu0 %v402
    %510 = vmatpush.msra.mxu0 %v400
    %511 = vmatpush.msra.mxu0 %v398
    %512 = vmatpush.msra.mxu0 %v396
    %513 = vmatpush.msra.mxu0 %v394
    %514 = vmatpush.msra.mxu0 %v392
    %515 = vmatpush.msra.mxu0 %v390
    %516 = vmatmul.f32.gmra.mxu0 %v324
    %v517 = vpop.f32.mrf.mxu0
    %v518 = vadd.f32 %v498, %v517
    %519 = vdwg.mxu0
    %520 = vmatpush.msra.mxu0 %v452
    %521 = vmatpush.msra.mxu0 %v450
    %522 = vmatpush.msra.mxu0 %v448
    %523 = vmatpush.msra.mxu0 %v446
    %524 = vmatpush.msra.mxu0 %v444
    %525 = vmatpush.msra.mxu0 %v442
    %526 = vmatpush.msra.mxu0 %v440
    %527 = vmatpush.msra.mxu0 %v438
    %528 = vmatpush.msra.mxu0 %v436
    %529 = vmatpush.msra.mxu0 %v434
    %530 = vmatpush.msra.mxu0 %v432
    %531 = vmatpush.msra.mxu0 %v430
    %532 = vmatpush.msra.mxu0 %v428
    %533 = vmatpush.msra.mxu0 %v426
    %534 = vmatpush.msra.mxu0 %v424
    %535 = vmatpush.msra.mxu0 %v422
    %536 = vmatmul.f32.gmra.mxu0 %v325
    %v537 = vpop.f32.mrf.mxu0
    %v538 = vadd.f32 %v518, %v537
    %539 = vdwg.mxu0
    %540 = vmatpush.msra.mxu0 %v357
    %541 = vmatpush.msra.mxu0 %v355
    %542 = vmatpush.msra.mxu0 %v353
    %543 = vmatpush.msra.mxu0 %v351
    %544 = vmatpush.msra.mxu0 %v349
    %545 = vmatpush.msra.mxu0 %v347
    %546 = vmatpush.msra.mxu0 %v345
    %547 = vmatpush.msra.mxu0 %v343
    %548 = vmatpush.msra.mxu0 %v341
    %549 = vmatpush.msra.mxu0 %v339
    %550 = vmatpush.msra.mxu0 %v337
    %551 = vmatpush.msra.mxu0 %v335
    %552 = vmatpush.msra.mxu0 %v333
    %553 = vmatpush.msra.mxu0 %v331
    %554 = vmatpush.msra.mxu0 %v329
    %555 = vmatpush.msra.mxu0 %v327
    %556 = vmatmul.f32.gmra.mxu0 %v322
    %v557 = vpop.f32.mrf.mxu0
    %v558 = vadd.f32 %v457, %v557
    %559 = vdwg.mxu0
    %560 = vmatpush.msra.mxu0 %v389
    %561 = vmatpush.msra.mxu0 %v387
    %562 = vmatpush.msra.mxu0 %v385
    %563 = vmatpush.msra.mxu0 %v383
    %564 = vmatpush.msra.mxu0 %v381
    %565 = vmatpush.msra.mxu0 %v379
    %566 = vmatpush.msra.mxu0 %v377
    %567 = vmatpush.msra.mxu0 %v375
    %568 = vmatpush.msra.mxu0 %v373
    %569 = vmatpush.msra.mxu0 %v371
    %570 = vmatpush.msra.mxu0 %v369
    %571 = vmatpush.msra.mxu0 %v367
    %572 = vmatpush.msra.mxu0 %v365
    %573 = vmatpush.msra.mxu0 %v363
    %574 = vmatpush.msra.mxu0 %v361
    %575 = vmatpush.msra.mxu0 %v359
    %576 = vmatmul.f32.gmra.mxu0 %v323
    %v577 = vpop.f32.mrf.mxu0
    %v578 = vadd.f32 %v558, %v577
    %579 = vdwg.mxu0
    %580 = vmatpush.msra.mxu0 %v421
    %581 = vmatpush.msra.mxu0 %v419
    %582 = vmatpush.msra.mxu0 %v417
    %583 = vmatpush.msra.mxu0 %v415
    %584 = vmatpush.msra.mxu0 %v413
    %585 = vmatpush.msra.mxu0 %v411
    %586 = vmatpush.msra.mxu0 %v409
    %587 = vmatpush.msra.mxu0 %v407
    %588 = vmatpush.msra.mxu0 %v405
    %589 = vmatpush.msra.mxu0 %v403
    %590 = vmatpush.msra.mxu0 %v401
    %591 = vmatpush.msra.mxu0 %v399
    %592 = vmatpush.msra.mxu0 %v397
    %593 = vmatpush.msra.mxu0 %v395
    %594 = vmatpush.msra.mxu0 %v393
    %595 = vmatpush.msra.mxu0 %v391
    %596 = vmatmul.f32.gmra.mxu0 %v324
    %v597 = vpop.f32.mrf.mxu0
    %v598 = vadd.f32 %v578, %v597
    %599 = vdwg.mxu0
    %600 = vmatpush.msra.mxu0 %v453
    %601 = vmatpush.msra.mxu0 %v451
    %602 = vmatpush.msra.mxu0 %v449
    %603 = vmatpush.msra.mxu0 %v447
    %604 = vmatpush.msra.mxu0 %v445
    %605 = vmatpush.msra.mxu0 %v443
    %606 = vmatpush.msra.mxu0 %v441
    %607 = vmatpush.msra.mxu0 %v439
    %608 = vmatpush.msra.mxu0 %v437
    %609 = vmatpush.msra.mxu0 %v435
    %610 = vmatpush.msra.mxu0 %v433
    %611 = vmatpush.msra.mxu0 %v431
    %612 = vmatpush.msra.mxu0 %v429
    %613 = vmatpush.msra.mxu0 %v427
    %614 = vmatpush.msra.mxu0 %v425
    %615 = vmatpush.msra.mxu0 %v423
    %616 = vmatmul.f32.gmra.mxu0 %v325
    %v617 = vpop.f32.mrf.mxu0
    %v618 = vadd.f32 %v598, %v617
    %619 = vdwg.mxu0
    %v620 = vld [vmem:[%s2] sm:$0xff]
    %v621 = vld [vmem:[%s2 + $0x8] sm:$0xff]
    %v622 = vld [vmem:[%s2 + $0x10] sm:$0xff]
    %v623 = vld [vmem:[%s2 + $0x18] sm:$0xff]
    %v624 = vld [vmem:[#allocation7] sm:$0xff]
    %v625 = vld [vmem:[#allocation7 + $0x8] sm:$0xff]
    %v626 = vld [vmem:[#allocation7 + $0x10] sm:$0xff]
    %v627 = vld [vmem:[#allocation7 + $0x18] sm:$0xff]
    %v628 = vld [vmem:[#allocation7 + $0x20] sm:$0xff]
    %v629 = vld [vmem:[#allocation7 + $0x28] sm:$0xff]
    %v630 = vld [vmem:[#allocation7 + $0x30] sm:$0xff]
    %v631 = vld [vmem:[#allocation7 + $0x38] sm:$0xff]
    %v632 = vld [vmem:[#allocation7 + $0x40] sm:$0xff]
    %v633 = vld [vmem:[#allocation7 + $0x48] sm:$0xff]
    %v634 = vld [vmem:[#allocation7 + $0x50] sm:$0xff]
    %v635 = vld [vmem:[#allocation7 + $0x58] sm:$0xff]
    %v636 = vld [vmem:[#allocation7 + $0x60] sm:$0xff]
    %v637 = vld [vmem:[#allocation7 + $0x68] sm:$0xff]
    %v638 = vld [vmem:[#allocation7 + $0x70] sm:$0xff]
    %v639 = vld [vmem:[#allocation7 + $0x78] sm:$0xff]
    %v640 = vld [vmem:[#allocation7 + $0x80] sm:$0xff]
    %v641 = vld [vmem:[#allocation7 + $0x88] sm:$0xff]
    %v642 = vld [vmem:[#allocation7 + $0x90] sm:$0xff]
    %v643 = vld [vmem:[#allocation7 + $0x98] sm:$0xff]
    %v644 = vld [vmem:[#allocation7 + $0xa0] sm:$0xff]
    %v645 = vld [vmem:[#allocation7 + $0xa8] sm:$0xff]
    %v646 = vld [vmem:[#allocation7 + $0xb0] sm:$0xff]
    %v647 = vld [vmem:[#allocation7 + $0xb8] sm:$0xff]
    %v648 = vld [vmem:[#allocation7 + $0xc0] sm:$0xff]
    %v649 = vld [vmem:[#allocation7 + $0xc8] sm:$0xff]
    %v650 = vld [vmem:[#allocation7 + $0xd0] sm:$0xff]
    %v651 = vld [vmem:[#allocation7 + $0xd8] sm:$0xff]
    %v652 = vld [vmem:[#allocation7 + $0xe0] sm:$0xff]
    %v653 = vld [vmem:[#allocation7 + $0xe8] sm:$0xff]
    %v654 = vld [vmem:[#allocation7 + $0xf0] sm:$0xff]
    %v655 = vld [vmem:[#allocation7 + $0xf8] sm:$0xff]
    %v656 = vld [vmem:[#allocation7 + $0x100] sm:$0xff]
    %v657 = vld [vmem:[#allocation7 + $0x108] sm:$0xff]
    %v658 = vld [vmem:[#allocation7 + $0x110] sm:$0xff]
    %v659 = vld [vmem:[#allocation7 + $0x118] sm:$0xff]
    %v660 = vld [vmem:[#allocation7 + $0x120] sm:$0xff]
    %v661 = vld [vmem:[#allocation7 + $0x128] sm:$0xff]
    %v662 = vld [vmem:[#allocation7 + $0x130] sm:$0xff]
    %v663 = vld [vmem:[#allocation7 + $0x138] sm:$0xff]
    %v664 = vld [vmem:[#allocation7 + $0x140] sm:$0xff]
    %v665 = vld [vmem:[#allocation7 + $0x148] sm:$0xff]
    %v666 = vld [vmem:[#allocation7 + $0x150] sm:$0xff]
    %v667 = vld [vmem:[#allocation7 + $0x158] sm:$0xff]
    %v668 = vld [vmem:[#allocation7 + $0x160] sm:$0xff]
    %v669 = vld [vmem:[#allocation7 + $0x168] sm:$0xff]
    %v670 = vld [vmem:[#allocation7 + $0x170] sm:$0xff]
    %v671 = vld [vmem:[#allocation7 + $0x178] sm:$0xff]
    %v672 = vld [vmem:[#allocation7 + $0x180] sm:$0xff]
    %v673 = vld [vmem:[#allocation7 + $0x188] sm:$0xff]
    %v674 = vld [vmem:[#allocation7 + $0x190] sm:$0xff]
    %v675 = vld [vmem:[#allocation7 + $0x198] sm:$0xff]
    %v676 = vld [vmem:[#allocation7 + $0x1a0] sm:$0xff]
    %v677 = vld [vmem:[#allocation7 + $0x1a8] sm:$0xff]
    %v678 = vld [vmem:[#allocation7 + $0x1b0] sm:$0xff]
    %v679 = vld [vmem:[#allocation7 + $0x1b8] sm:$0xff]
    %v680 = vld [vmem:[#allocation7 + $0x1c0] sm:$0xff]
    %v681 = vld [vmem:[#allocation7 + $0x1c8] sm:$0xff]
    %v682 = vld [vmem:[#allocation7 + $0x1d0] sm:$0xff]
    %v683 = vld [vmem:[#allocation7 + $0x1d8] sm:$0xff]
    %v684 = vld [vmem:[#allocation7 + $0x1e0] sm:$0xff]
    %v685 = vld [vmem:[#allocation7 + $0x1e8] sm:$0xff]
    %v686 = vld [vmem:[#allocation7 + $0x1f0] sm:$0xff]
    %v687 = vld [vmem:[#allocation7 + $0x1f8] sm:$0xff]
    %v688 = vld [vmem:[#allocation7 + $0x200] sm:$0xff]
    %v689 = vld [vmem:[#allocation7 + $0x208] sm:$0xff]
    %v690 = vld [vmem:[#allocation7 + $0x210] sm:$0xff]
    %v691 = vld [vmem:[#allocation7 + $0x218] sm:$0xff]
    %v692 = vld [vmem:[#allocation7 + $0x220] sm:$0xff]
    %v693 = vld [vmem:[#allocation7 + $0x228] sm:$0xff]
    %v694 = vld [vmem:[#allocation7 + $0x230] sm:$0xff]
    %v695 = vld [vmem:[#allocation7 + $0x238] sm:$0xff]
    %v696 = vld [vmem:[#allocation7 + $0x240] sm:$0xff]
    %v697 = vld [vmem:[#allocation7 + $0x248] sm:$0xff]
    %v698 = vld [vmem:[#allocation7 + $0x250] sm:$0xff]
    %v699 = vld [vmem:[#allocation7 + $0x258] sm:$0xff]
    %v700 = vld [vmem:[#allocation7 + $0x260] sm:$0xff]
    %v701 = vld [vmem:[#allocation7 + $0x268] sm:$0xff]
    %v702 = vld [vmem:[#allocation7 + $0x270] sm:$0xff]
    %v703 = vld [vmem:[#allocation7 + $0x278] sm:$0xff]
    %v704 = vld [vmem:[#allocation7 + $0x280] sm:$0xff]
    %v705 = vld [vmem:[#allocation7 + $0x288] sm:$0xff]
    %v706 = vld [vmem:[#allocation7 + $0x290] sm:$0xff]
    %v707 = vld [vmem:[#allocation7 + $0x298] sm:$0xff]
    %v708 = vld [vmem:[#allocation7 + $0x2a0] sm:$0xff]
    %v709 = vld [vmem:[#allocation7 + $0x2a8] sm:$0xff]
    %v710 = vld [vmem:[#allocation7 + $0x2b0] sm:$0xff]
    %v711 = vld [vmem:[#allocation7 + $0x2b8] sm:$0xff]
    %v712 = vld [vmem:[#allocation7 + $0x2c0] sm:$0xff]
    %v713 = vld [vmem:[#allocation7 + $0x2c8] sm:$0xff]
    %v714 = vld [vmem:[#allocation7 + $0x2d0] sm:$0xff]
    %v715 = vld [vmem:[#allocation7 + $0x2d8] sm:$0xff]
    %v716 = vld [vmem:[#allocation7 + $0x2e0] sm:$0xff]
    %v717 = vld [vmem:[#allocation7 + $0x2e8] sm:$0xff]
    %v718 = vld [vmem:[#allocation7 + $0x2f0] sm:$0xff]
    %v719 = vld [vmem:[#allocation7 + $0x2f8] sm:$0xff]
    %v720 = vld [vmem:[#allocation7 + $0x300] sm:$0xff]
    %v721 = vld [vmem:[#allocation7 + $0x308] sm:$0xff]
    %v722 = vld [vmem:[#allocation7 + $0x310] sm:$0xff]
    %v723 = vld [vmem:[#allocation7 + $0x318] sm:$0xff]
    %v724 = vld [vmem:[#allocation7 + $0x320] sm:$0xff]
    %v725 = vld [vmem:[#allocation7 + $0x328] sm:$0xff]
    %v726 = vld [vmem:[#allocation7 + $0x330] sm:$0xff]
    %v727 = vld [vmem:[#allocation7 + $0x338] sm:$0xff]
    %v728 = vld [vmem:[#allocation7 + $0x340] sm:$0xff]
    %v729 = vld [vmem:[#allocation7 + $0x348] sm:$0xff]
    %v730 = vld [vmem:[#allocation7 + $0x350] sm:$0xff]
    %v731 = vld [vmem:[#allocation7 + $0x358] sm:$0xff]
    %v732 = vld [vmem:[#allocation7 + $0x360] sm:$0xff]
    %v733 = vld [vmem:[#allocation7 + $0x368] sm:$0xff]
    %v734 = vld [vmem:[#allocation7 + $0x370] sm:$0xff]
    %v735 = vld [vmem:[#allocation7 + $0x378] sm:$0xff]
    %v736 = vld [vmem:[#allocation7 + $0x380] sm:$0xff]
    %v737 = vld [vmem:[#allocation7 + $0x388] sm:$0xff]
    %v738 = vld [vmem:[#allocation7 + $0x390] sm:$0xff]
    %v739 = vld [vmem:[#allocation7 + $0x398] sm:$0xff]
    %v740 = vld [vmem:[#allocation7 + $0x3a0] sm:$0xff]
    %v741 = vld [vmem:[#allocation7 + $0x3a8] sm:$0xff]
    %v742 = vld [vmem:[#allocation7 + $0x3b0] sm:$0xff]
    %v743 = vld [vmem:[#allocation7 + $0x3b8] sm:$0xff]
    %v744 = vld [vmem:[#allocation7 + $0x3c0] sm:$0xff]
    %v745 = vld [vmem:[#allocation7 + $0x3c8] sm:$0xff]
    %v746 = vld [vmem:[#allocation7 + $0x3d0] sm:$0xff]
    %v747 = vld [vmem:[#allocation7 + $0x3d8] sm:$0xff]
    %v748 = vld [vmem:[#allocation7 + $0x3e0] sm:$0xff]
    %v749 = vld [vmem:[#allocation7 + $0x3e8] sm:$0xff]
    %v750 = vld [vmem:[#allocation7 + $0x3f0] sm:$0xff]
    %v751 = vld [vmem:[#allocation7 + $0x3f8] sm:$0xff]
    %v752 = vld [vmem:[%s12] sm:$0x3]
    %v754 = vperm.slane %v752, 0
    %v755 = vperm.slane %v752, 1
    %758 = vmatpush.msra.mxu0 %v654
    %759 = vmatpush.msra.mxu0 %v652
    %760 = vmatpush.msra.mxu0 %v650
    %761 = vmatpush.msra.mxu0 %v648
    %762 = vmatpush.msra.mxu0 %v646
    %763 = vmatpush.msra.mxu0 %v644
    %764 = vmatpush.msra.mxu0 %v642
    %765 = vmatpush.msra.mxu0 %v640
    %766 = vmatpush.msra.mxu0 %v638
    %767 = vmatpush.msra.mxu0 %v636
    %768 = vmatpush.msra.mxu0 %v634
    %769 = vmatpush.msra.mxu0 %v632
    %770 = vmatpush.msra.mxu0 %v630
    %771 = vmatpush.msra.mxu0 %v628
    %772 = vmatpush.msra.mxu0 %v626
    %773 = vmatpush.msra.mxu0 %v624
    %774 = vmatmul.f32.gmra.mxu0 %v620
    %v775 = vpop.f32.mrf.mxu0
    %v776 = vadd.f32 %v754, %v775
    %777 = vdwg.mxu0
    %778 = vmatpush.msra.mxu0 %v686
    %779 = vmatpush.msra.mxu0 %v684
    %780 = vmatpush.msra.mxu0 %v682
    %781 = vmatpush.msra.mxu0 %v680
    %782 = vmatpush.msra.mxu0 %v678
    %783 = vmatpush.msra.mxu0 %v676
    %784 = vmatpush.msra.mxu0 %v674
    %785 = vmatpush.msra.mxu0 %v672
    %786 = vmatpush.msra.mxu0 %v670
    %787 = vmatpush.msra.mxu0 %v668
    %788 = vmatpush.msra.mxu0 %v666
    %789 = vmatpush.msra.mxu0 %v664
    %790 = vmatpush.msra.mxu0 %v662
    %791 = vmatpush.msra.mxu0 %v660
    %792 = vmatpush.msra.mxu0 %v658
    %793 = vmatpush.msra.mxu0 %v656
    %794 = vmatmul.f32.gmra.mxu0 %v621
    %v795 = vpop.f32.mrf.mxu0
    %v796 = vadd.f32 %v776, %v795
    %797 = vdwg.mxu0
    %798 = vmatpush.msra.mxu0 %v718
    %799 = vmatpush.msra.mxu0 %v716
    %800 = vmatpush.msra.mxu0 %v714
    %801 = vmatpush.msra.mxu0 %v712
    %802 = vmatpush.msra.mxu0 %v710
    %803 = vmatpush.msra.mxu0 %v708
    %804 = vmatpush.msra.mxu0 %v706
    %805 = vmatpush.msra.mxu0 %v704
    %806 = vmatpush.msra.mxu0 %v702
    %807 = vmatpush.msra.mxu0 %v700
    %808 = vmatpush.msra.mxu0 %v698
    %809 = vmatpush.msra.mxu0 %v696
    %810 = vmatpush.msra.mxu0 %v694
    %811 = vmatpush.msra.mxu0 %v692
    %812 = vmatpush.msra.mxu0 %v690
    %813 = vmatpush.msra.mxu0 %v688
    %814 = vmatmul.f32.gmra.mxu0 %v622
    %v815 = vpop.f32.mrf.mxu0
    %v816 = vadd.f32 %v796, %v815
    %817 = vdwg.mxu0
    %818 = vmatpush.msra.mxu0 %v750
    %819 = vmatpush.msra.mxu0 %v748
    %820 = vmatpush.msra.mxu0 %v746
    %821 = vmatpush.msra.mxu0 %v744
    %822 = vmatpush.msra.mxu0 %v742
    %823 = vmatpush.msra.mxu0 %v740
    %824 = vmatpush.msra.mxu0 %v738
    %825 = vmatpush.msra.mxu0 %v736
    %826 = vmatpush.msra.mxu0 %v734
    %827 = vmatpush.msra.mxu0 %v732
    %828 = vmatpush.msra.mxu0 %v730
    %829 = vmatpush.msra.mxu0 %v728
    %830 = vmatpush.msra.mxu0 %v726
    %831 = vmatpush.msra.mxu0 %v724
    %832 = vmatpush.msra.mxu0 %v722
    %833 = vmatpush.msra.mxu0 %v720
    %834 = vmatmul.f32.gmra.mxu0 %v623
    %v835 = vpop.f32.mrf.mxu0
    %v836 = vadd.f32 %v816, %v835
    %837 = vdwg.mxu0
    %838 = vmatpush.msra.mxu0 %v655
    %839 = vmatpush.msra.mxu0 %v653
    %840 = vmatpush.msra.mxu0 %v651
    %841 = vmatpush.msra.mxu0 %v649
    %842 = vmatpush.msra.mxu0 %v647
    %843 = vmatpush.msra.mxu0 %v645
    %844 = vmatpush.msra.mxu0 %v643
    %845 = vmatpush.msra.mxu0 %v641
    %846 = vmatpush.msra.mxu0 %v639
    %847 = vmatpush.msra.mxu0 %v637
    %848 = vmatpush.msra.mxu0 %v635
    %849 = vmatpush.msra.mxu0 %v633
    %850 = vmatpush.msra.mxu0 %v631
    %851 = vmatpush.msra.mxu0 %v629
    %852 = vmatpush.msra.mxu0 %v627
    %853 = vmatpush.msra.mxu0 %v625
    %854 = vmatmul.f32.gmra.mxu0 %v620
    %v855 = vpop.f32.mrf.mxu0
    %v856 = vadd.f32 %v755, %v855
    %857 = vdwg.mxu0
    %858 = vmatpush.msra.mxu0 %v687
    %859 = vmatpush.msra.mxu0 %v685
    %860 = vmatpush.msra.mxu0 %v683
    %861 = vmatpush.msra.mxu0 %v681
    %862 = vmatpush.msra.mxu0 %v679
    %863 = vmatpush.msra.mxu0 %v677
    %864 = vmatpush.msra.mxu0 %v675
    %865 = vmatpush.msra.mxu0 %v673
    %866 = vmatpush.msra.mxu0 %v671
    %867 = vmatpush.msra.mxu0 %v669
    %868 = vmatpush.msra.mxu0 %v667
    %869 = vmatpush.msra.mxu0 %v665
    %870 = vmatpush.msra.mxu0 %v663
    %871 = vmatpush.msra.mxu0 %v661
    %872 = vmatpush.msra.mxu0 %v659
    %873 = vmatpush.msra.mxu0 %v657
    %874 = vmatmul.f32.gmra.mxu0 %v621
    %v875 = vpop.f32.mrf.mxu0
    %v876 = vadd.f32 %v856, %v875
    %877 = vdwg.mxu0
    %878 = vmatpush.msra.mxu0 %v719
    %879 = vmatpush.msra.mxu0 %v717
    %880 = vmatpush.msra.mxu0 %v715
    %881 = vmatpush.msra.mxu0 %v713
    %882 = vmatpush.msra.mxu0 %v711
    %883 = vmatpush.msra.mxu0 %v709
    %884 = vmatpush.msra.mxu0 %v707
    %885 = vmatpush.msra.mxu0 %v705
    %886 = vmatpush.msra.mxu0 %v703
    %887 = vmatpush.msra.mxu0 %v701
    %888 = vmatpush.msra.mxu0 %v699
    %889 = vmatpush.msra.mxu0 %v697
    %890 = vmatpush.msra.mxu0 %v695
    %891 = vmatpush.msra.mxu0 %v693
    %892 = vmatpush.msra.mxu0 %v691
    %893 = vmatpush.msra.mxu0 %v689
    %894 = vmatmul.f32.gmra.mxu0 %v622
    %v895 = vpop.f32.mrf.mxu0
    %v896 = vadd.f32 %v876, %v895
    %897 = vdwg.mxu0
    %898 = vmatpush.msra.mxu0 %v751
    %899 = vmatpush.msra.mxu0 %v749
    %900 = vmatpush.msra.mxu0 %v747
    %901 = vmatpush.msra.mxu0 %v745
    %902 = vmatpush.msra.mxu0 %v743
    %903 = vmatpush.msra.mxu0 %v741
    %904 = vmatpush.msra.mxu0 %v739
    %905 = vmatpush.msra.mxu0 %v737
    %906 = vmatpush.msra.mxu0 %v735
    %907 = vmatpush.msra.mxu0 %v733
    %908 = vmatpush.msra.mxu0 %v731
    %909 = vmatpush.msra.mxu0 %v729
    %910 = vmatpush.msra.mxu0 %v727
    %911 = vmatpush.msra.mxu0 %v725
    %912 = vmatpush.msra.mxu0 %v723
    %913 = vmatpush.msra.mxu0 %v721
    %914 = vmatmul.f32.gmra.mxu0 %v623
    %v915 = vpop.f32.mrf.mxu0
    %v916 = vadd.f32 %v896, %v915
    %917 = vdwg.mxu0
    %v918 = vld [vmem:[#allocation8] sm:$0xff]
    %v919 = vld [vmem:[#allocation8 + $0x8] sm:$0xff]
    %v920 = vld [vmem:[#allocation8 + $0x10] sm:$0xff]
    %v921 = vld [vmem:[#allocation8 + $0x18] sm:$0xff]
    %v922 = vld [vmem:[#allocation8 + $0x20] sm:$0xff]
    %v923 = vld [vmem:[#allocation8 + $0x28] sm:$0xff]
    %v924 = vld [vmem:[#allocation8 + $0x30] sm:$0xff]
    %v925 = vld [vmem:[#allocation8 + $0x38] sm:$0xff]
    %v926 = vld [vmem:[#allocation8 + $0x40] sm:$0xff]
    %v927 = vld [vmem:[#allocation8 + $0x48] sm:$0xff]
    %v928 = vld [vmem:[#allocation8 + $0x50] sm:$0xff]
    %v929 = vld [vmem:[#allocation8 + $0x58] sm:$0xff]
    %v930 = vld [vmem:[#allocation8 + $0x60] sm:$0xff]
    %v931 = vld [vmem:[#allocation8 + $0x68] sm:$0xff]
    %v932 = vld [vmem:[#allocation8 + $0x70] sm:$0xff]
    %v933 = vld [vmem:[#allocation8 + $0x78] sm:$0xff]
    %v934 = vld [vmem:[#allocation8 + $0x80] sm:$0xff]
    %v935 = vld [vmem:[#allocation8 + $0x88] sm:$0xff]
    %v936 = vld [vmem:[#allocation8 + $0x90] sm:$0xff]
    %v937 = vld [vmem:[#allocation8 + $0x98] sm:$0xff]
    %v938 = vld [vmem:[#allocation8 + $0xa0] sm:$0xff]
    %v939 = vld [vmem:[#allocation8 + $0xa8] sm:$0xff]
    %v940 = vld [vmem:[#allocation8 + $0xb0] sm:$0xff]
    %v941 = vld [vmem:[#allocation8 + $0xb8] sm:$0xff]
    %v942 = vld [vmem:[#allocation8 + $0xc0] sm:$0xff]
    %v943 = vld [vmem:[#allocation8 + $0xc8] sm:$0xff]
    %v944 = vld [vmem:[#allocation8 + $0xd0] sm:$0xff]
    %v945 = vld [vmem:[#allocation8 + $0xd8] sm:$0xff]
    %v946 = vld [vmem:[#allocation8 + $0xe0] sm:$0xff]
    %v947 = vld [vmem:[#allocation8 + $0xe8] sm:$0xff]
    %v948 = vld [vmem:[#allocation8 + $0xf0] sm:$0xff]
    %v949 = vld [vmem:[#allocation8 + $0xf8] sm:$0xff]
    %v950 = vld [vmem:[#allocation8 + $0x100] sm:$0xff]
    %v951 = vld [vmem:[#allocation8 + $0x108] sm:$0xff]
    %v952 = vld [vmem:[#allocation8 + $0x110] sm:$0xff]
    %v953 = vld [vmem:[#allocation8 + $0x118] sm:$0xff]
    %v954 = vld [vmem:[#allocation8 + $0x120] sm:$0xff]
    %v955 = vld [vmem:[#allocation8 + $0x128] sm:$0xff]
    %v956 = vld [vmem:[#allocation8 + $0x130] sm:$0xff]
    %v957 = vld [vmem:[#allocation8 + $0x138] sm:$0xff]
    %v958 = vld [vmem:[#allocation8 + $0x140] sm:$0xff]
    %v959 = vld [vmem:[#allocation8 + $0x148] sm:$0xff]
    %v960 = vld [vmem:[#allocation8 + $0x150] sm:$0xff]
    %v961 = vld [vmem:[#allocation8 + $0x158] sm:$0xff]
    %v962 = vld [vmem:[#allocation8 + $0x160] sm:$0xff]
    %v963 = vld [vmem:[#allocation8 + $0x168] sm:$0xff]
    %v964 = vld [vmem:[#allocation8 + $0x170] sm:$0xff]
    %v965 = vld [vmem:[#allocation8 + $0x178] sm:$0xff]
    %v966 = vld [vmem:[#allocation8 + $0x180] sm:$0xff]
    %v967 = vld [vmem:[#allocation8 + $0x188] sm:$0xff]
    %v968 = vld [vmem:[#allocation8 + $0x190] sm:$0xff]
    %v969 = vld [vmem:[#allocation8 + $0x198] sm:$0xff]
    %v970 = vld [vmem:[#allocation8 + $0x1a0] sm:$0xff]
    %v971 = vld [vmem:[#allocation8 + $0x1a8] sm:$0xff]
    %v972 = vld [vmem:[#allocation8 + $0x1b0] sm:$0xff]
    %v973 = vld [vmem:[#allocation8 + $0x1b8] sm:$0xff]
    %v974 = vld [vmem:[#allocation8 + $0x1c0] sm:$0xff]
    %v975 = vld [vmem:[#allocation8 + $0x1c8] sm:$0xff]
    %v976 = vld [vmem:[#allocation8 + $0x1d0] sm:$0xff]
    %v977 = vld [vmem:[#allocation8 + $0x1d8] sm:$0xff]
    %v978 = vld [vmem:[#allocation8 + $0x1e0] sm:$0xff]
    %v979 = vld [vmem:[#allocation8 + $0x1e8] sm:$0xff]
    %v980 = vld [vmem:[#allocation8 + $0x1f0] sm:$0xff]
    %v981 = vld [vmem:[#allocation8 + $0x1f8] sm:$0xff]
    %v982 = vld [vmem:[%s14] sm:$0x3]
    %v984 = vperm.slane %v982, 0
    %v985 = vperm.slane %v982, 1
    %988 = vmatpush.msra.mxu0 %v948
    %989 = vmatpush.msra.mxu0 %v946
    %990 = vmatpush.msra.mxu0 %v944
    %991 = vmatpush.msra.mxu0 %v942
    %992 = vmatpush.msra.mxu0 %v940
    %993 = vmatpush.msra.mxu0 %v938
    %994 = vmatpush.msra.mxu0 %v936
    %995 = vmatpush.msra.mxu0 %v934
    %996 = vmatpush.msra.mxu0 %v932
    %997 = vmatpush.msra.mxu0 %v930
    %998 = vmatpush.msra.mxu0 %v928
    %999 = vmatpush.msra.mxu0 %v926
    %1000 = vmatpush.msra.mxu0 %v924
    %1001 = vmatpush.msra.mxu0 %v922
    %1002 = vmatpush.msra.mxu0 %v920
    %1003 = vmatpush.msra.mxu0 %v918
    %1004 = vmatmul.f32.gmra.mxu0 %v538
    %v1005 = vpop.f32.mrf.mxu0
    %v1006 = vadd.f32 %v984, %v1005
    %1007 = vdwg.mxu0
    %1008 = vmatpush.msra.mxu0 %v980
    %1009 = vmatpush.msra.mxu0 %v978
    %1010 = vmatpush.msra.mxu0 %v976
    %1011 = vmatpush.msra.mxu0 %v974
    %1012 = vmatpush.msra.mxu0 %v972
    %1013 = vmatpush.msra.mxu0 %v970
    %1014 = vmatpush.msra.mxu0 %v968
    %1015 = vmatpush.msra.mxu0 %v966
    %1016 = vmatpush.msra.mxu0 %v964
    %1017 = vmatpush.msra.mxu0 %v962
    %1018 = vmatpush.msra.mxu0 %v960
    %1019 = vmatpush.msra.mxu0 %v958
    %1020 = vmatpush.msra.mxu0 %v956
    %1021 = vmatpush.msra.mxu0 %v954
    %1022 = vmatpush.msra.mxu0 %v952
    %1023 = vmatpush.msra.mxu0 %v950
    %1024 = vmatmul.f32.gmra.mxu0 %v618
    %v1025 = vpop.f32.mrf.mxu0
    %v1026 = vadd.f32 %v1006, %v1025
    %1027 = vdwg.mxu0
    %1028 = vmatpush.msra.mxu0 %v949
    %1029 = vmatpush.msra.mxu0 %v947
    %1030 = vmatpush.msra.mxu0 %v945
    %1031 = vmatpush.msra.mxu0 %v943
    %1032 = vmatpush.msra.mxu0 %v941
    %1033 = vmatpush.msra.mxu0 %v939
    %1034 = vmatpush.msra.mxu0 %v937
    %1035 = vmatpush.msra.mxu0 %v935
    %1036 = vmatpush.msra.mxu0 %v933
    %1037 = vmatpush.msra.mxu0 %v931
    %1038 = vmatpush.msra.mxu0 %v929
    %1039 = vmatpush.msra.mxu0 %v927
    %1040 = vmatpush.msra.mxu0 %v925
    %1041 = vmatpush.msra.mxu0 %v923
    %1042 = vmatpush.msra.mxu0 %v921
    %1043 = vmatpush.msra.mxu0 %v919
    %1044 = vmatmul.f32.gmra.mxu0 %v538
    %v1045 = vpop.f32.mrf.mxu0
    %v1046 = vadd.f32 %v985, %v1045
    %1047 = vdwg.mxu0
    %1048 = vmatpush.msra.mxu0 %v981
    %1049 = vmatpush.msra.mxu0 %v979
    %1050 = vmatpush.msra.mxu0 %v977
    %1051 = vmatpush.msra.mxu0 %v975
    %1052 = vmatpush.msra.mxu0 %v973
    %1053 = vmatpush.msra.mxu0 %v971
    %1054 = vmatpush.msra.mxu0 %v969
    %1055 = vmatpush.msra.mxu0 %v967
    %1056 = vmatpush.msra.mxu0 %v965
    %1057 = vmatpush.msra.mxu0 %v963
    %1058 = vmatpush.msra.mxu0 %v961
    %1059 = vmatpush.msra.mxu0 %v959
    %1060 = vmatpush.msra.mxu0 %v957
    %1061 = vmatpush.msra.mxu0 %v955
    %1062 = vmatpush.msra.mxu0 %v953
    %1063 = vmatpush.msra.mxu0 %v951
    %1064 = vmatmul.f32.gmra.mxu0 %v618
    %v1065 = vpop.f32.mrf.mxu0
    %v1066 = vadd.f32 %v1046, %v1065
    %1067 = vdwg.mxu0
    %v1068 = vmax.f32 %v1026, 0.0
    %v1069 = vmax.f32 %v1066, 0.0
    %v1070 = vld [vmem:[#allocation10] sm:$0xff]
    %v1071 = vld [vmem:[#allocation10 + $0x8] sm:$0xff]
    %v1072 = vld [vmem:[#allocation10 + $0x10] sm:$0xff]
    %v1073 = vld [vmem:[#allocation10 + $0x18] sm:$0xff]
    %v1074 = vld [vmem:[#allocation10 + $0x20] sm:$0xff]
    %v1075 = vld [vmem:[#allocation10 + $0x28] sm:$0xff]
    %v1076 = vld [vmem:[#allocation10 + $0x30] sm:$0xff]
    %v1077 = vld [vmem:[#allocation10 + $0x38] sm:$0xff]
    %v1078 = vld [vmem:[#allocation10 + $0x40] sm:$0xff]
    %v1079 = vld [vmem:[#allocation10 + $0x48] sm:$0xff]
    %v1080 = vld [vmem:[#allocation10 + $0x50] sm:$0xff]
    %v1081 = vld [vmem:[#allocation10 + $0x58] sm:$0xff]
    %v1082 = vld [vmem:[#allocation10 + $0x60] sm:$0xff]
    %v1083 = vld [vmem:[#allocation10 + $0x68] sm:$0xff]
    %v1084 = vld [vmem:[#allocation10 + $0x70] sm:$0xff]
    %v1085 = vld [vmem:[#allocation10 + $0x78] sm:$0xff]
    %v1086 = vld [vmem:[#allocation10 + $0x80] sm:$0xff]
    %v1087 = vld [vmem:[#allocation10 + $0x88] sm:$0xff]
    %v1088 = vld [vmem:[#allocation10 + $0x90] sm:$0xff]
    %v1089 = vld [vmem:[#allocation10 + $0x98] sm:$0xff]
    %v1090 = vld [vmem:[#allocation10 + $0xa0] sm:$0xff]
    %v1091 = vld [vmem:[#allocation10 + $0xa8] sm:$0xff]
    %v1092 = vld [vmem:[#allocation10 + $0xb0] sm:$0xff]
    %v1093 = vld [vmem:[#allocation10 + $0xb8] sm:$0xff]
    %v1094 = vld [vmem:[#allocation10 + $0xc0] sm:$0xff]
    %v1095 = vld [vmem:[#allocation10 + $0xc8] sm:$0xff]
    %v1096 = vld [vmem:[#allocation10 + $0xd0] sm:$0xff]
    %v1097 = vld [vmem:[#allocation10 + $0xd8] sm:$0xff]
    %v1098 = vld [vmem:[#allocation10 + $0xe0] sm:$0xff]
    %v1099 = vld [vmem:[#allocation10 + $0xe8] sm:$0xff]
    %v1100 = vld [vmem:[#allocation10 + $0xf0] sm:$0xff]
    %v1101 = vld [vmem:[#allocation10 + $0xf8] sm:$0xff]
    %v1102 = vld [vmem:[#allocation10 + $0x100] sm:$0xff]
    %v1103 = vld [vmem:[#allocation10 + $0x108] sm:$0xff]
    %v1104 = vld [vmem:[#allocation10 + $0x110] sm:$0xff]
    %v1105 = vld [vmem:[#allocation10 + $0x118] sm:$0xff]
    %v1106 = vld [vmem:[#allocation10 + $0x120] sm:$0xff]
    %v1107 = vld [vmem:[#allocation10 + $0x128] sm:$0xff]
    %v1108 = vld [vmem:[#allocation10 + $0x130] sm:$0xff]
    %v1109 = vld [vmem:[#allocation10 + $0x138] sm:$0xff]
    %v1110 = vld [vmem:[#allocation10 + $0x140] sm:$0xff]
    %v1111 = vld [vmem:[#allocation10 + $0x148] sm:$0xff]
    %v1112 = vld [vmem:[#allocation10 + $0x150] sm:$0xff]
    %v1113 = vld [vmem:[#allocation10 + $0x158] sm:$0xff]
    %v1114 = vld [vmem:[#allocation10 + $0x160] sm:$0xff]
    %v1115 = vld [vmem:[#allocation10 + $0x168] sm:$0xff]
    %v1116 = vld [vmem:[#allocation10 + $0x170] sm:$0xff]
    %v1117 = vld [vmem:[#allocation10 + $0x178] sm:$0xff]
    %v1118 = vld [vmem:[#allocation10 + $0x180] sm:$0xff]
    %v1119 = vld [vmem:[#allocation10 + $0x188] sm:$0xff]
    %v1120 = vld [vmem:[#allocation10 + $0x190] sm:$0xff]
    %v1121 = vld [vmem:[#allocation10 + $0x198] sm:$0xff]
    %v1122 = vld [vmem:[#allocation10 + $0x1a0] sm:$0xff]
    %v1123 = vld [vmem:[#allocation10 + $0x1a8] sm:$0xff]
    %v1124 = vld [vmem:[#allocation10 + $0x1b0] sm:$0xff]
    %v1125 = vld [vmem:[#allocation10 + $0x1b8] sm:$0xff]
    %v1126 = vld [vmem:[#allocation10 + $0x1c0] sm:$0xff]
    %v1127 = vld [vmem:[#allocation10 + $0x1c8] sm:$0xff]
    %v1128 = vld [vmem:[#allocation10 + $0x1d0] sm:$0xff]
    %v1129 = vld [vmem:[#allocation10 + $0x1d8] sm:$0xff]
    %v1130 = vld [vmem:[#allocation10 + $0x1e0] sm:$0xff]
    %v1131 = vld [vmem:[#allocation10 + $0x1e8] sm:$0xff]
    %v1132 = vld [vmem:[#allocation10 + $0x1f0] sm:$0xff]
    %v1133 = vld [vmem:[#allocation10 + $0x1f8] sm:$0xff]
    %v1134 = vld [vmem:[%s16] sm:$0x3]
    %v1136 = vperm.slane %v1134, 0
    %v1137 = vperm.slane %v1134, 1
    %1140 = vmatpush.msra.mxu0 %v1100
    %1141 = vmatpush.msra.mxu0 %v1098
    %1142 = vmatpush.msra.mxu0 %v1096
    %1143 = vmatpush.msra.mxu0 %v1094
    %1144 = vmatpush.msra.mxu0 %v1092
    %1145 = vmatpush.msra.mxu0 %v1090
    %1146 = vmatpush.msra.mxu0 %v1088
    %1147 = vmatpush.msra.mxu0 %v1086
    %1148 = vmatpush.msra.mxu0 %v1084
    %1149 = vmatpush.msra.mxu0 %v1082
    %1150 = vmatpush.msra.mxu0 %v1080
    %1151 = vmatpush.msra.mxu0 %v1078
    %1152 = vmatpush.msra.mxu0 %v1076
    %1153 = vmatpush.msra.mxu0 %v1074
    %1154 = vmatpush.msra.mxu0 %v1072
    %1155 = vmatpush.msra.mxu0 %v1070
    %1156 = vmatmul.f32.gmra.mxu0 %v836
    %v1157 = vpop.f32.mrf.mxu0
    %v1158 = vadd.f32 %v1136, %v1157
    %1159 = vdwg.mxu0
    %1160 = vmatpush.msra.mxu0 %v1132
    %1161 = vmatpush.msra.mxu0 %v1130
    %1162 = vmatpush.msra.mxu0 %v1128
    %1163 = vmatpush.msra.mxu0 %v1126
    %1164 = vmatpush.msra.mxu0 %v1124
    %1165 = vmatpush.msra.mxu0 %v1122
    %1166 = vmatpush.msra.mxu0 %v1120
    %1167 = vmatpush.msra.mxu0 %v1118
    %1168 = vmatpush.msra.mxu0 %v1116
    %1169 = vmatpush.msra.mxu0 %v1114
    %1170 = vmatpush.msra.mxu0 %v1112
    %1171 = vmatpush.msra.mxu0 %v1110
    %1172 = vmatpush.msra.mxu0 %v1108
    %1173 = vmatpush.msra.mxu0 %v1106
    %1174 = vmatpush.msra.mxu0 %v1104
    %1175 = vmatpush.msra.mxu0 %v1102
    %1176 = vmatmul.f32.gmra.mxu0 %v916
    %v1177 = vpop.f32.mrf.mxu0
    %v1178 = vadd.f32 %v1158, %v1177
    %1179 = vdwg.mxu0
    %1180 = vmatpush.msra.mxu0 %v1101
    %1181 = vmatpush.msra.mxu0 %v1099
    %1182 = vmatpush.msra.mxu0 %v1097
    %1183 = vmatpush.msra.mxu0 %v1095
    %1184 = vmatpush.msra.mxu0 %v1093
    %1185 = vmatpush.msra.mxu0 %v1091
    %1186 = vmatpush.msra.mxu0 %v1089
    %1187 = vmatpush.msra.mxu0 %v1087
    %1188 = vmatpush.msra.mxu0 %v1085
    %1189 = vmatpush.msra.mxu0 %v1083
    %1190 = vmatpush.msra.mxu0 %v1081
    %1191 = vmatpush.msra.mxu0 %v1079
    %1192 = vmatpush.msra.mxu0 %v1077
    %1193 = vmatpush.msra.mxu0 %v1075
    %1194 = vmatpush.msra.mxu0 %v1073
    %1195 = vmatpush.msra.mxu0 %v1071
    %1196 = vmatmul.f32.gmra.mxu0 %v836
    %v1197 = vpop.f32.mrf.mxu0
    %v1198 = vadd.f32 %v1137, %v1197
    %1199 = vdwg.mxu0
    %1200 = vmatpush.msra.mxu0 %v1133
    %1201 = vmatpush.msra.mxu0 %v1131
    %1202 = vmatpush.msra.mxu0 %v1129
    %1203 = vmatpush.msra.mxu0 %v1127
    %1204 = vmatpush.msra.mxu0 %v1125
    %1205 = vmatpush.msra.mxu0 %v1123
    %1206 = vmatpush.msra.mxu0 %v1121
    %1207 = vmatpush.msra.mxu0 %v1119
    %1208 = vmatpush.msra.mxu0 %v1117
    %1209 = vmatpush.msra.mxu0 %v1115
    %1210 = vmatpush.msra.mxu0 %v1113
    %1211 = vmatpush.msra.mxu0 %v1111
    %1212 = vmatpush.msra.mxu0 %v1109
    %1213 = vmatpush.msra.mxu0 %v1107
    %1214 = vmatpush.msra.mxu0 %v1105
    %1215 = vmatpush.msra.mxu0 %v1103
    %1216 = vmatmul.f32.gmra.mxu0 %v916
    %v1217 = vpop.f32.mrf.mxu0
    %v1218 = vadd.f32 %v1198, %v1217
    %1219 = vdwg.mxu0
    %v1220 = vmax.f32 %v1178, 0.0
    %v1221 = vmax.f32 %v1218, 0.0
    %v1222 = vld [vmem:[#allocation11] sm:$0xff]
    %v1223 = vld [vmem:[#allocation11 + $0x8] sm:$0xff]
    %v1224 = vld [vmem:[#allocation11 + $0x10] sm:$0xff]
    %v1225 = vld [vmem:[#allocation11 + $0x18] sm:$0xff]
    %v1226 = vld [vmem:[#allocation11 + $0x20] sm:$0xff]
    %v1227 = vld [vmem:[#allocation11 + $0x28] sm:$0xff]
    %v1228 = vld [vmem:[#allocation11 + $0x30] sm:$0xff]
    %v1229 = vld [vmem:[#allocation11 + $0x38] sm:$0xff]
    %v1230 = vld [vmem:[#allocation11 + $0x40] sm:$0xff]
    %v1231 = vld [vmem:[#allocation11 + $0x48] sm:$0xff]
    %v1232 = vld [vmem:[#allocation11 + $0x50] sm:$0xff]
    %v1233 = vld [vmem:[#allocation11 + $0x58] sm:$0xff]
    %v1234 = vld [vmem:[#allocation11 + $0x60] sm:$0xff]
    %v1235 = vld [vmem:[#allocation11 + $0x68] sm:$0xff]
    %v1236 = vld [vmem:[#allocation11 + $0x70] sm:$0xff]
    %v1237 = vld [vmem:[#allocation11 + $0x78] sm:$0xff]
    %v1238 = vld [vmem:[#allocation11 + $0x80] sm:$0xff]
    %v1239 = vld [vmem:[#allocation11 + $0x88] sm:$0xff]
    %v1240 = vld [vmem:[#allocation11 + $0x90] sm:$0xff]
    %v1241 = vld [vmem:[#allocation11 + $0x98] sm:$0xff]
    %v1242 = vld [vmem:[#allocation11 + $0xa0] sm:$0xff]
    %v1243 = vld [vmem:[#allocation11 + $0xa8] sm:$0xff]
    %v1244 = vld [vmem:[#allocation11 + $0xb0] sm:$0xff]
    %v1245 = vld [vmem:[#allocation11 + $0xb8] sm:$0xff]
    %v1246 = vld [vmem:[#allocation11 + $0xc0] sm:$0xff]
    %v1247 = vld [vmem:[#allocation11 + $0xc8] sm:$0xff]
    %v1248 = vld [vmem:[#allocation11 + $0xd0] sm:$0xff]
    %v1249 = vld [vmem:[#allocation11 + $0xd8] sm:$0xff]
    %v1250 = vld [vmem:[#allocation11 + $0xe0] sm:$0xff]
    %v1251 = vld [vmem:[#allocation11 + $0xe8] sm:$0xff]
    %v1252 = vld [vmem:[#allocation11 + $0xf0] sm:$0xff]
    %v1253 = vld [vmem:[#allocation11 + $0xf8] sm:$0xff]
    %v1254 = vld [vmem:[#allocation11 + $0x100] sm:$0xff]
    %v1255 = vld [vmem:[#allocation11 + $0x108] sm:$0xff]
    %v1256 = vld [vmem:[#allocation11 + $0x110] sm:$0xff]
    %v1257 = vld [vmem:[#allocation11 + $0x118] sm:$0xff]
    %v1258 = vld [vmem:[#allocation11 + $0x120] sm:$0xff]
    %v1259 = vld [vmem:[#allocation11 + $0x128] sm:$0xff]
    %v1260 = vld [vmem:[#allocation11 + $0x130] sm:$0xff]
    %v1261 = vld [vmem:[#allocation11 + $0x138] sm:$0xff]
    %v1262 = vld [vmem:[#allocation11 + $0x140] sm:$0xff]
    %v1263 = vld [vmem:[#allocation11 + $0x148] sm:$0xff]
    %v1264 = vld [vmem:[#allocation11 + $0x150] sm:$0xff]
    %v1265 = vld [vmem:[#allocation11 + $0x158] sm:$0xff]
    %v1266 = vld [vmem:[#allocation11 + $0x160] sm:$0xff]
    %v1267 = vld [vmem:[#allocation11 + $0x168] sm:$0xff]
    %v1268 = vld [vmem:[#allocation11 + $0x170] sm:$0xff]
    %v1269 = vld [vmem:[#allocation11 + $0x178] sm:$0xff]
    %v1270 = vld [vmem:[#allocation11 + $0x180] sm:$0xff]
    %v1271 = vld [vmem:[#allocation11 + $0x188] sm:$0xff]
    %v1272 = vld [vmem:[#allocation11 + $0x190] sm:$0xff]
    %v1273 = vld [vmem:[#allocation11 + $0x198] sm:$0xff]
    %v1274 = vld [vmem:[#allocation11 + $0x1a0] sm:$0xff]
    %v1275 = vld [vmem:[#allocation11 + $0x1a8] sm:$0xff]
    %v1276 = vld [vmem:[#allocation11 + $0x1b0] sm:$0xff]
    %v1277 = vld [vmem:[#allocation11 + $0x1b8] sm:$0xff]
    %v1278 = vld [vmem:[#allocation11 + $0x1c0] sm:$0xff]
    %v1279 = vld [vmem:[#allocation11 + $0x1c8] sm:$0xff]
    %v1280 = vld [vmem:[#allocation11 + $0x1d0] sm:$0xff]
    %v1281 = vld [vmem:[#allocation11 + $0x1d8] sm:$0xff]
    %v1282 = vld [vmem:[#allocation11 + $0x1e0] sm:$0xff]
    %v1283 = vld [vmem:[#allocation11 + $0x1e8] sm:$0xff]
    %v1284 = vld [vmem:[#allocation11 + $0x1f0] sm:$0xff]
    %v1285 = vld [vmem:[#allocation11 + $0x1f8] sm:$0xff]
    %v1286 = vld [vmem:[%s18] sm:$0x3]
    %v1288 = vperm.slane %v1286, 0
    %v1289 = vperm.slane %v1286, 1
    %1292 = vmatpush.msra.mxu0 %v1252
    %1293 = vmatpush.msra.mxu0 %v1250
    %1294 = vmatpush.msra.mxu0 %v1248
    %1295 = vmatpush.msra.mxu0 %v1246
    %1296 = vmatpush.msra.mxu0 %v1244
    %1297 = vmatpush.msra.mxu0 %v1242
    %1298 = vmatpush.msra.mxu0 %v1240
    %1299 = vmatpush.msra.mxu0 %v1238
    %1300 = vmatpush.msra.mxu0 %v1236
    %1301 = vmatpush.msra.mxu0 %v1234
    %1302 = vmatpush.msra.mxu0 %v1232
    %1303 = vmatpush.msra.mxu0 %v1230
    %1304 = vmatpush.msra.mxu0 %v1228
    %1305 = vmatpush.msra.mxu0 %v1226
    %1306 = vmatpush.msra.mxu0 %v1224
    %1307 = vmatpush.msra.mxu0 %v1222
    %1308 = vmatmul.f32.gmra.mxu0 %v320
    %v1309 = vpop.f32.mrf.mxu0
    %v1310 = vadd.f32 %v1288, %v1309
    %1311 = vdwg.mxu0
    %1312 = vmatpush.msra.mxu0 %v1284
    %1313 = vmatpush.msra.mxu0 %v1282
    %1314 = vmatpush.msra.mxu0 %v1280
    %1315 = vmatpush.msra.mxu0 %v1278
    %1316 = vmatpush.msra.mxu0 %v1276
    %1317 = vmatpush.msra.mxu0 %v1274
    %1318 = vmatpush.msra.mxu0 %v1272
    %1319 = vmatpush.msra.mxu0 %v1270
    %1320 = vmatpush.msra.mxu0 %v1268
    %1321 = vmatpush.msra.mxu0 %v1266
    %1322 = vmatpush.msra.mxu0 %v1264
    %1323 = vmatpush.msra.mxu0 %v1262
    %1324 = vmatpush.msra.mxu0 %v1260
    %1325 = vmatpush.msra.mxu0 %v1258
    %1326 = vmatpush.msra.mxu0 %v1256
    %1327 = vmatpush.msra.mxu0 %v1254
    %1328 = vmatmul.f32.gmra.mxu0 %v321
    %v1329 = vpop.f32.mrf.mxu0
    %v1330 = vadd.f32 %v1310, %v1329
    %1331 = vdwg.mxu0
    %1332 = vmatpush.msra.mxu0 %v1253
    %1333 = vmatpush.msra.mxu0 %v1251
    %1334 = vmatpush.msra.mxu0 %v1249
    %1335 = vmatpush.msra.mxu0 %v1247
    %1336 = vmatpush.msra.mxu0 %v1245
    %1337 = vmatpush.msra.mxu0 %v1243
    %1338 = vmatpush.msra.mxu0 %v1241
    %1339 = vmatpush.msra.mxu0 %v1239
    %1340 = vmatpush.msra.mxu0 %v1237
    %1341 = vmatpush.msra.mxu0 %v1235
    %1342 = vmatpush.msra.mxu0 %v1233
    %1343 = vmatpush.msra.mxu0 %v1231
    %1344 = vmatpush.msra.mxu0 %v1229
    %1345 = vmatpush.msra.mxu0 %v1227
    %1346 = vmatpush.msra.mxu0 %v1225
    %1347 = vmatpush.msra.mxu0 %v1223
    %1348 = vmatmul.f32.gmra.mxu0 %v320
    %v1349 = vpop.f32.mrf.mxu0
    %v1350 = vadd.f32 %v1289, %v1349
    %1351 = vdwg.mxu0
    %1352 = vmatpush.msra.mxu0 %v1285
    %1353 = vmatpush.msra.mxu0 %v1283
    %1354 = vmatpush.msra.mxu0 %v1281
    %1355 = vmatpush.msra.mxu0 %v1279
    %1356 = vmatpush.msra.mxu0 %v1277
    %1357 = vmatpush.msra.mxu0 %v1275
    %1358 = vmatpush.msra.mxu0 %v1273
    %1359 = vmatpush.msra.mxu0 %v1271
    %1360 = vmatpush.msra.mxu0 %v1269
    %1361 = vmatpush.msra.mxu0 %v1267
    %1362 = vmatpush.msra.mxu0 %v1265
    %1363 = vmatpush.msra.mxu0 %v1263
    %1364 = vmatpush.msra.mxu0 %v1261
    %1365 = vmatpush.msra.mxu0 %v1259
    %1366 = vmatpush.msra.mxu0 %v1257
    %1367 = vmatpush.msra.mxu0 %v1255
    %1368 = vmatmul.f32.gmra.mxu0 %v321
    %v1369 = vpop.f32.mrf.mxu0
    %v1370 = vadd.f32 %v1350, %v1369
    %1371 = vdwg.mxu0
    %v1372 = vmax.f32 %v1330, 0.0
    %v1373 = vmax.f32 %v1370, 0.0
    %v1374 = vmul.f32 %v1068, %v1220
    %v1375 = vmul.f32 %v1069, %v1221
    %v1376 = vmul.f32 %v1374, %v1372
    %v1377 = vmul.f32 %v1375, %v1373
    %s1378 = scalar_lea.vmem [#allocation8], 512
    %v1379 = vld [vmem:[%s1378] sm:$0xff]
    %v1380 = vld [vmem:[%s1378 + $0x8] sm:$0xff]
    %v1381 = vld [vmem:[%s1378 + $0x10] sm:$0xff]
    %v1382 = vld [vmem:[%s1378 + $0x18] sm:$0xff]
    %v1383 = vld [vmem:[%s1378 + $0x20] sm:$0xff]
    %v1384 = vld [vmem:[%s1378 + $0x28] sm:$0xff]
    %v1385 = vld [vmem:[%s1378 + $0x30] sm:$0xff]
    %v1386 = vld [vmem:[%s1378 + $0x38] sm:$0xff]
    %v1387 = vld [vmem:[%s1378 + $0x40] sm:$0xff]
    %v1388 = vld [vmem:[%s1378 + $0x48] sm:$0xff]
    %v1389 = vld [vmem:[%s1378 + $0x50] sm:$0xff]
    %v1390 = vld [vmem:[%s1378 + $0x58] sm:$0xff]
    %v1391 = vld [vmem:[%s1378 + $0x60] sm:$0xff]
    %v1392 = vld [vmem:[%s1378 + $0x68] sm:$0xff]
    %v1393 = vld [vmem:[%s1378 + $0x70] sm:$0xff]
    %v1394 = vld [vmem:[%s1378 + $0x78] sm:$0xff]
    %v1395 = vld [vmem:[%s1378 + $0x80] sm:$0xff]
    %v1396 = vld [vmem:[%s1378 + $0x88] sm:$0xff]
    %v1397 = vld [vmem:[%s1378 + $0x90] sm:$0xff]
    %v1398 = vld [vmem:[%s1378 + $0x98] sm:$0xff]
    %v1399 = vld [vmem:[%s1378 + $0xa0] sm:$0xff]
    %v1400 = vld [vmem:[%s1378 + $0xa8] sm:$0xff]
    %v1401 = vld [vmem:[%s1378 + $0xb0] sm:$0xff]
    %v1402 = vld [vmem:[%s1378 + $0xb8] sm:$0xff]
    %v1403 = vld [vmem:[%s1378 + $0xc0] sm:$0xff]
    %v1404 = vld [vmem:[%s1378 + $0xc8] sm:$0xff]
    %v1405 = vld [vmem:[%s1378 + $0xd0] sm:$0xff]
    %v1406 = vld [vmem:[%s1378 + $0xd8] sm:$0xff]
    %v1407 = vld [vmem:[%s1378 + $0xe0] sm:$0xff]
    %v1408 = vld [vmem:[%s1378 + $0xe8] sm:$0xff]
    %v1409 = vld [vmem:[%s1378 + $0xf0] sm:$0xff]
    %v1410 = vld [vmem:[%s1378 + $0xf8] sm:$0xff]
    %v1411 = vld [vmem:[%s1378 + $0x100] sm:$0xff]
    %v1412 = vld [vmem:[%s1378 + $0x108] sm:$0xff]
    %v1413 = vld [vmem:[%s1378 + $0x110] sm:$0xff]
    %v1414 = vld [vmem:[%s1378 + $0x118] sm:$0xff]
    %v1415 = vld [vmem:[%s1378 + $0x120] sm:$0xff]
    %v1416 = vld [vmem:[%s1378 + $0x128] sm:$0xff]
    %v1417 = vld [vmem:[%s1378 + $0x130] sm:$0xff]
    %v1418 = vld [vmem:[%s1378 + $0x138] sm:$0xff]
    %v1419 = vld [vmem:[%s1378 + $0x140] sm:$0xff]
    %v1420 = vld [vmem:[%s1378 + $0x148] sm:$0xff]
    %v1421 = vld [vmem:[%s1378 + $0x150] sm:$0xff]
    %v1422 = vld [vmem:[%s1378 + $0x158] sm:$0xff]
    %v1423 = vld [vmem:[%s1378 + $0x160] sm:$0xff]
    %v1424 = vld [vmem:[%s1378 + $0x168] sm:$0xff]
    %v1425 = vld [vmem:[%s1378 + $0x170] sm:$0xff]
    %v1426 = vld [vmem:[%s1378 + $0x178] sm:$0xff]
    %v1427 = vld [vmem:[%s1378 + $0x180] sm:$0xff]
    %v1428 = vld [vmem:[%s1378 + $0x188] sm:$0xff]
    %v1429 = vld [vmem:[%s1378 + $0x190] sm:$0xff]
    %v1430 = vld [vmem:[%s1378 + $0x198] sm:$0xff]
    %v1431 = vld [vmem:[%s1378 + $0x1a0] sm:$0xff]
    %v1432 = vld [vmem:[%s1378 + $0x1a8] sm:$0xff]
    %v1433 = vld [vmem:[%s1378 + $0x1b0] sm:$0xff]
    %v1434 = vld [vmem:[%s1378 + $0x1b8] sm:$0xff]
    %v1435 = vld [vmem:[%s1378 + $0x1c0] sm:$0xff]
    %v1436 = vld [vmem:[%s1378 + $0x1c8] sm:$0xff]
    %v1437 = vld [vmem:[%s1378 + $0x1d0] sm:$0xff]
    %v1438 = vld [vmem:[%s1378 + $0x1d8] sm:$0xff]
    %v1439 = vld [vmem:[%s1378 + $0x1e0] sm:$0xff]
    %v1440 = vld [vmem:[%s1378 + $0x1e8] sm:$0xff]
    %v1441 = vld [vmem:[%s1378 + $0x1f0] sm:$0xff]
    %v1442 = vld [vmem:[%s1378 + $0x1f8] sm:$0xff]
    %s1443 = scalar_lea.vmem %s14, 2
    %v1444 = vld [vmem:[%s1443] sm:$0x3]
    %v1446 = vperm.slane %v1444, 0
    %v1447 = vperm.slane %v1444, 1
    %1450 = vmatpush.msra.mxu0 %v1409
    %1451 = vmatpush.msra.mxu0 %v1407
    %1452 = vmatpush.msra.mxu0 %v1405
    %1453 = vmatpush.msra.mxu0 %v1403
    %1454 = vmatpush.msra.mxu0 %v1401
    %1455 = vmatpush.msra.mxu0 %v1399
    %1456 = vmatpush.msra.mxu0 %v1397
    %1457 = vmatpush.msra.mxu0 %v1395
    %1458 = vmatpush.msra.mxu0 %v1393
    %1459 = vmatpush.msra.mxu0 %v1391
    %1460 = vmatpush.msra.mxu0 %v1389
    %1461 = vmatpush.msra.mxu0 %v1387
    %1462 = vmatpush.msra.mxu0 %v1385
    %1463 = vmatpush.msra.mxu0 %v1383
    %1464 = vmatpush.msra.mxu0 %v1381
    %1465 = vmatpush.msra.mxu0 %v1379
    %1466 = vmatmul.f32.gmra.mxu0 %v538
    %v1467 = vpop.f32.mrf.mxu0
    %v1468 = vadd.f32 %v1446, %v1467
    %1469 = vdwg.mxu0
    %1470 = vmatpush.msra.mxu0 %v1441
    %1471 = vmatpush.msra.mxu0 %v1439
    %1472 = vmatpush.msra.mxu0 %v1437
    %1473 = vmatpush.msra.mxu0 %v1435
    %1474 = vmatpush.msra.mxu0 %v1433
    %1475 = vmatpush.msra.mxu0 %v1431
    %1476 = vmatpush.msra.mxu0 %v1429
    %1477 = vmatpush.msra.mxu0 %v1427
    %1478 = vmatpush.msra.mxu0 %v1425
    %1479 = vmatpush.msra.mxu0 %v1423
    %1480 = vmatpush.msra.mxu0 %v1421
    %1481 = vmatpush.msra.mxu0 %v1419
    %1482 = vmatpush.msra.mxu0 %v1417
    %1483 = vmatpush.msra.mxu0 %v1415
    %1484 = vmatpush.msra.mxu0 %v1413
    %1485 = vmatpush.msra.mxu0 %v1411
    %1486 = vmatmul.f32.gmra.mxu0 %v618
    %v1487 = vpop.f32.mrf.mxu0
    %v1488 = vadd.f32 %v1468, %v1487
    %1489 = vdwg.mxu0
    %1490 = vmatpush.msra.mxu0 %v1410
    %1491 = vmatpush.msra.mxu0 %v1408
    %1492 = vmatpush.msra.mxu0 %v1406
    %1493 = vmatpush.msra.mxu0 %v1404
    %1494 = vmatpush.msra.mxu0 %v1402
    %1495 = vmatpush.msra.mxu0 %v1400
    %1496 = vmatpush.msra.mxu0 %v1398
    %1497 = vmatpush.msra.mxu0 %v1396
    %1498 = vmatpush.msra.mxu0 %v1394
    %1499 = vmatpush.msra.mxu0 %v1392
    %1500 = vmatpush.msra.mxu0 %v1390
    %1501 = vmatpush.msra.mxu0 %v1388
    %1502 = vmatpush.msra.mxu0 %v1386
    %1503 = vmatpush.msra.mxu0 %v1384
    %1504 = vmatpush.msra.mxu0 %v1382
    %1505 = vmatpush.msra.mxu0 %v1380
    %1506 = vmatmul.f32.gmra.mxu0 %v538
    %v1507 = vpop.f32.mrf.mxu0
    %v1508 = vadd.f32 %v1447, %v1507
    %1509 = vdwg.mxu0
    %1510 = vmatpush.msra.mxu0 %v1442
    %1511 = vmatpush.msra.mxu0 %v1440
    %1512 = vmatpush.msra.mxu0 %v1438
    %1513 = vmatpush.msra.mxu0 %v1436
    %1514 = vmatpush.msra.mxu0 %v1434
    %1515 = vmatpush.msra.mxu0 %v1432
    %1516 = vmatpush.msra.mxu0 %v1430
    %1517 = vmatpush.msra.mxu0 %v1428
    %1518 = vmatpush.msra.mxu0 %v1426
    %1519 = vmatpush.msra.mxu0 %v1424
    %1520 = vmatpush.msra.mxu0 %v1422
    %1521 = vmatpush.msra.mxu0 %v1420
    %1522 = vmatpush.msra.mxu0 %v1418
    %1523 = vmatpush.msra.mxu0 %v1416
    %1524 = vmatpush.msra.mxu0 %v1414
    %1525 = vmatpush.msra.mxu0 %v1412
    %1526 = vmatmul.f32.gmra.mxu0 %v618
    %v1527 = vpop.f32.mrf.mxu0
    %v1528 = vadd.f32 %v1508, %v1527
    %1529 = vdwg.mxu0
    %v1530 = vmax.f32 %v1488, 0.0
    %v1531 = vmax.f32 %v1528, 0.0
    %s1532 = scalar_lea.vmem [#allocation10], 512
    %v1533 = vld [vmem:[%s1532] sm:$0xff]
    %v1534 = vld [vmem:[%s1532 + $0x8] sm:$0xff]
    %v1535 = vld [vmem:[%s1532 + $0x10] sm:$0xff]
    %v1536 = vld [vmem:[%s1532 + $0x18] sm:$0xff]
    %v1537 = vld [vmem:[%s1532 + $0x20] sm:$0xff]
    %v1538 = vld [vmem:[%s1532 + $0x28] sm:$0xff]
    %v1539 = vld [vmem:[%s1532 + $0x30] sm:$0xff]
    %v1540 = vld [vmem:[%s1532 + $0x38] sm:$0xff]
    %v1541 = vld [vmem:[%s1532 + $0x40] sm:$0xff]
    %v1542 = vld [vmem:[%s1532 + $0x48] sm:$0xff]
    %v1543 = vld [vmem:[%s1532 + $0x50] sm:$0xff]
    %v1544 = vld [vmem:[%s1532 + $0x58] sm:$0xff]
    %v1545 = vld [vmem:[%s1532 + $0x60] sm:$0xff]
    %v1546 = vld [vmem:[%s1532 + $0x68] sm:$0xff]
    %v1547 = vld [vmem:[%s1532 + $0x70] sm:$0xff]
    %v1548 = vld [vmem:[%s1532 + $0x78] sm:$0xff]
    %v1549 = vld [vmem:[%s1532 + $0x80] sm:$0xff]
    %v1550 = vld [vmem:[%s1532 + $0x88] sm:$0xff]
    %v1551 = vld [vmem:[%s1532 + $0x90] sm:$0xff]
    %v1552 = vld [vmem:[%s1532 + $0x98] sm:$0xff]
    %v1553 = vld [vmem:[%s1532 + $0xa0] sm:$0xff]
    %v1554 = vld [vmem:[%s1532 + $0xa8] sm:$0xff]
    %v1555 = vld [vmem:[%s1532 + $0xb0] sm:$0xff]
    %v1556 = vld [vmem:[%s1532 + $0xb8] sm:$0xff]
    %v1557 = vld [vmem:[%s1532 + $0xc0] sm:$0xff]
    %v1558 = vld [vmem:[%s1532 + $0xc8] sm:$0xff]
    %v1559 = vld [vmem:[%s1532 + $0xd0] sm:$0xff]
    %v1560 = vld [vmem:[%s1532 + $0xd8] sm:$0xff]
    %v1561 = vld [vmem:[%s1532 + $0xe0] sm:$0xff]
    %v1562 = vld [vmem:[%s1532 + $0xe8] sm:$0xff]
    %v1563 = vld [vmem:[%s1532 + $0xf0] sm:$0xff]
    %v1564 = vld [vmem:[%s1532 + $0xf8] sm:$0xff]
    %v1565 = vld [vmem:[%s1532 + $0x100] sm:$0xff]
    %v1566 = vld [vmem:[%s1532 + $0x108] sm:$0xff]
    %v1567 = vld [vmem:[%s1532 + $0x110] sm:$0xff]
    %v1568 = vld [vmem:[%s1532 + $0x118] sm:$0xff]
    %v1569 = vld [vmem:[%s1532 + $0x120] sm:$0xff]
    %v1570 = vld [vmem:[%s1532 + $0x128] sm:$0xff]
    %v1571 = vld [vmem:[%s1532 + $0x130] sm:$0xff]
    %v1572 = vld [vmem:[%s1532 + $0x138] sm:$0xff]
    %v1573 = vld [vmem:[%s1532 + $0x140] sm:$0xff]
    %v1574 = vld [vmem:[%s1532 + $0x148] sm:$0xff]
    %v1575 = vld [vmem:[%s1532 + $0x150] sm:$0xff]
    %v1576 = vld [vmem:[%s1532 + $0x158] sm:$0xff]
    %v1577 = vld [vmem:[%s1532 + $0x160] sm:$0xff]
    %v1578 = vld [vmem:[%s1532 + $0x168] sm:$0xff]
    %v1579 = vld [vmem:[%s1532 + $0x170] sm:$0xff]
    %v1580 = vld [vmem:[%s1532 + $0x178] sm:$0xff]
    %v1581 = vld [vmem:[%s1532 + $0x180] sm:$0xff]
    %v1582 = vld [vmem:[%s1532 + $0x188] sm:$0xff]
    %v1583 = vld [vmem:[%s1532 + $0x190] sm:$0xff]
    %v1584 = vld [vmem:[%s1532 + $0x198] sm:$0xff]
    %v1585 = vld [vmem:[%s1532 + $0x1a0] sm:$0xff]
    %v1586 = vld [vmem:[%s1532 + $0x1a8] sm:$0xff]
    %v1587 = vld [vmem:[%s1532 + $0x1b0] sm:$0xff]
    %v1588 = vld [vmem:[%s1532 + $0x1b8] sm:$0xff]
    %v1589 = vld [vmem:[%s1532 + $0x1c0] sm:$0xff]
    %v1590 = vld [vmem:[%s1532 + $0x1c8] sm:$0xff]
    %v1591 = vld [vmem:[%s1532 + $0x1d0] sm:$0xff]
    %v1592 = vld [vmem:[%s1532 + $0x1d8] sm:$0xff]
    %v1593 = vld [vmem:[%s1532 + $0x1e0] sm:$0xff]
    %v1594 = vld [vmem:[%s1532 + $0x1e8] sm:$0xff]
    %v1595 = vld [vmem:[%s1532 + $0x1f0] sm:$0xff]
    %v1596 = vld [vmem:[%s1532 + $0x1f8] sm:$0xff]
    %s1597 = scalar_lea.vmem %s16, 2
    %v1598 = vld [vmem:[%s1597] sm:$0x3]
    %v1600 = vperm.slane %v1598, 0
    %v1601 = vperm.slane %v1598, 1
    %1604 = vmatpush.msra.mxu0 %v1563
    %1605 = vmatpush.msra.mxu0 %v1561
    %1606 = vmatpush.msra.mxu0 %v1559
    %1607 = vmatpush.msra.mxu0 %v1557
    %1608 = vmatpush.msra.mxu0 %v1555
    %1609 = vmatpush.msra.mxu0 %v1553
    %1610 = vmatpush.msra.mxu0 %v1551
    %1611 = vmatpush.msra.mxu0 %v1549
    %1612 = vmatpush.msra.mxu0 %v1547
    %1613 = vmatpush.msra.mxu0 %v1545
    %1614 = vmatpush.msra.mxu0 %v1543
    %1615 = vmatpush.msra.mxu0 %v1541
    %1616 = vmatpush.msra.mxu0 %v1539
    %1617 = vmatpush.msra.mxu0 %v1537
    %1618 = vmatpush.msra.mxu0 %v1535
    %1619 = vmatpush.msra.mxu0 %v1533
    %1620 = vmatmul.f32.gmra.mxu0 %v836
    %v1621 = vpop.f32.mrf.mxu0
    %v1622 = vadd.f32 %v1600, %v1621
    %1623 = vdwg.mxu0
    %1624 = vmatpush.msra.mxu0 %v1595
    %1625 = vmatpush.msra.mxu0 %v1593
    %1626 = vmatpush.msra.mxu0 %v1591
    %1627 = vmatpush.msra.mxu0 %v1589
    %1628 = vmatpush.msra.mxu0 %v1587
    %1629 = vmatpush.msra.mxu0 %v1585
    %1630 = vmatpush.msra.mxu0 %v1583
    %1631 = vmatpush.msra.mxu0 %v1581
    %1632 = vmatpush.msra.mxu0 %v1579
    %1633 = vmatpush.msra.mxu0 %v1577
    %1634 = vmatpush.msra.mxu0 %v1575
    %1635 = vmatpush.msra.mxu0 %v1573
    %1636 = vmatpush.msra.mxu0 %v1571
    %1637 = vmatpush.msra.mxu0 %v1569
    %1638 = vmatpush.msra.mxu0 %v1567
    %1639 = vmatpush.msra.mxu0 %v1565
    %1640 = vmatmul.f32.gmra.mxu0 %v916
    %v1641 = vpop.f32.mrf.mxu0
    %v1642 = vadd.f32 %v1622, %v1641
    %1643 = vdwg.mxu0
    %1644 = vmatpush.msra.mxu0 %v1564
    %1645 = vmatpush.msra.mxu0 %v1562
    %1646 = vmatpush.msra.mxu0 %v1560
    %1647 = vmatpush.msra.mxu0 %v1558
    %1648 = vmatpush.msra.mxu0 %v1556
    %1649 = vmatpush.msra.mxu0 %v1554
    %1650 = vmatpush.msra.mxu0 %v1552
    %1651 = vmatpush.msra.mxu0 %v1550
    %1652 = vmatpush.msra.mxu0 %v1548
    %1653 = vmatpush.msra.mxu0 %v1546
    %1654 = vmatpush.msra.mxu0 %v1544
    %1655 = vmatpush.msra.mxu0 %v1542
    %1656 = vmatpush.msra.mxu0 %v1540
    %1657 = vmatpush.msra.mxu0 %v1538
    %1658 = vmatpush.msra.mxu0 %v1536
    %1659 = vmatpush.msra.mxu0 %v1534
    %1660 = vmatmul.f32.gmra.mxu0 %v836
    %v1661 = vpop.f32.mrf.mxu0
    %v1662 = vadd.f32 %v1601, %v1661
    %1663 = vdwg.mxu0
    %1664 = vmatpush.msra.mxu0 %v1596
    %1665 = vmatpush.msra.mxu0 %v1594
    %1666 = vmatpush.msra.mxu0 %v1592
    %1667 = vmatpush.msra.mxu0 %v1590
    %1668 = vmatpush.msra.mxu0 %v1588
    %1669 = vmatpush.msra.mxu0 %v1586
    %1670 = vmatpush.msra.mxu0 %v1584
    %1671 = vmatpush.msra.mxu0 %v1582
    %1672 = vmatpush.msra.mxu0 %v1580
    %1673 = vmatpush.msra.mxu0 %v1578
    %1674 = vmatpush.msra.mxu0 %v1576
    %1675 = vmatpush.msra.mxu0 %v1574
    %1676 = vmatpush.msra.mxu0 %v1572
    %1677 = vmatpush.msra.mxu0 %v1570
    %1678 = vmatpush.msra.mxu0 %v1568
    %1679 = vmatpush.msra.mxu0 %v1566
    %1680 = vmatmul.f32.gmra.mxu0 %v916
    %v1681 = vpop.f32.mrf.mxu0
    %v1682 = vadd.f32 %v1662, %v1681
    %1683 = vdwg.mxu0
    %v1684 = vmax.f32 %v1642, 0.0
    %v1685 = vmax.f32 %v1682, 0.0
    %s1686 = scalar_lea.vmem [#allocation11], 512
    %v1687 = vld [vmem:[%s1686] sm:$0xff]
    %v1688 = vld [vmem:[%s1686 + $0x8] sm:$0xff]
    %v1689 = vld [vmem:[%s1686 + $0x10] sm:$0xff]
    %v1690 = vld [vmem:[%s1686 + $0x18] sm:$0xff]
    %v1691 = vld [vmem:[%s1686 + $0x20] sm:$0xff]
    %v1692 = vld [vmem:[%s1686 + $0x28] sm:$0xff]
    %v1693 = vld [vmem:[%s1686 + $0x30] sm:$0xff]
    %v1694 = vld [vmem:[%s1686 + $0x38] sm:$0xff]
    %v1695 = vld [vmem:[%s1686 + $0x40] sm:$0xff]
    %v1696 = vld [vmem:[%s1686 + $0x48] sm:$0xff]
    %v1697 = vld [vmem:[%s1686 + $0x50] sm:$0xff]
    %v1698 = vld [vmem:[%s1686 + $0x58] sm:$0xff]
    %v1699 = vld [vmem:[%s1686 + $0x60] sm:$0xff]
    %v1700 = vld [vmem:[%s1686 + $0x68] sm:$0xff]
    %v1701 = vld [vmem:[%s1686 + $0x70] sm:$0xff]
    %v1702 = vld [vmem:[%s1686 + $0x78] sm:$0xff]
    %v1703 = vld [vmem:[%s1686 + $0x80] sm:$0xff]
    %v1704 = vld [vmem:[%s1686 + $0x88] sm:$0xff]
    %v1705 = vld [vmem:[%s1686 + $0x90] sm:$0xff]
    %v1706 = vld [vmem:[%s1686 + $0x98] sm:$0xff]
    %v1707 = vld [vmem:[%s1686 + $0xa0] sm:$0xff]
    %v1708 = vld [vmem:[%s1686 + $0xa8] sm:$0xff]
    %v1709 = vld [vmem:[%s1686 + $0xb0] sm:$0xff]
    %v1710 = vld [vmem:[%s1686 + $0xb8] sm:$0xff]
    %v1711 = vld [vmem:[%s1686 + $0xc0] sm:$0xff]
    %v1712 = vld [vmem:[%s1686 + $0xc8] sm:$0xff]
    %v1713 = vld [vmem:[%s1686 + $0xd0] sm:$0xff]
    %v1714 = vld [vmem:[%s1686 + $0xd8] sm:$0xff]
    %v1715 = vld [vmem:[%s1686 + $0xe0] sm:$0xff]
    %v1716 = vld [vmem:[%s1686 + $0xe8] sm:$0xff]
    %v1717 = vld [vmem:[%s1686 + $0xf0] sm:$0xff]
    %v1718 = vld [vmem:[%s1686 + $0xf8] sm:$0xff]
    %v1719 = vld [vmem:[%s1686 + $0x100] sm:$0xff]
    %v1720 = vld [vmem:[%s1686 + $0x108] sm:$0xff]
    %v1721 = vld [vmem:[%s1686 + $0x110] sm:$0xff]
    %v1722 = vld [vmem:[%s1686 + $0x118] sm:$0xff]
    %v1723 = vld [vmem:[%s1686 + $0x120] sm:$0xff]
    %v1724 = vld [vmem:[%s1686 + $0x128] sm:$0xff]
    %v1725 = vld [vmem:[%s1686 + $0x130] sm:$0xff]
    %v1726 = vld [vmem:[%s1686 + $0x138] sm:$0xff]
    %v1727 = vld [vmem:[%s1686 + $0x140] sm:$0xff]
    %v1728 = vld [vmem:[%s1686 + $0x148] sm:$0xff]
    %v1729 = vld [vmem:[%s1686 + $0x150] sm:$0xff]
    %v1730 = vld [vmem:[%s1686 + $0x158] sm:$0xff]
    %v1731 = vld [vmem:[%s1686 + $0x160] sm:$0xff]
    %v1732 = vld [vmem:[%s1686 + $0x168] sm:$0xff]
    %v1733 = vld [vmem:[%s1686 + $0x170] sm:$0xff]
    %v1734 = vld [vmem:[%s1686 + $0x178] sm:$0xff]
    %v1735 = vld [vmem:[%s1686 + $0x180] sm:$0xff]
    %v1736 = vld [vmem:[%s1686 + $0x188] sm:$0xff]
    %v1737 = vld [vmem:[%s1686 + $0x190] sm:$0xff]
    %v1738 = vld [vmem:[%s1686 + $0x198] sm:$0xff]
    %v1739 = vld [vmem:[%s1686 + $0x1a0] sm:$0xff]
    %v1740 = vld [vmem:[%s1686 + $0x1a8] sm:$0xff]
    %v1741 = vld [vmem:[%s1686 + $0x1b0] sm:$0xff]
    %v1742 = vld [vmem:[%s1686 + $0x1b8] sm:$0xff]
    %v1743 = vld [vmem:[%s1686 + $0x1c0] sm:$0xff]
    %v1744 = vld [vmem:[%s1686 + $0x1c8] sm:$0xff]
    %v1745 = vld [vmem:[%s1686 + $0x1d0] sm:$0xff]
    %v1746 = vld [vmem:[%s1686 + $0x1d8] sm:$0xff]
    %v1747 = vld [vmem:[%s1686 + $0x1e0] sm:$0xff]
    %v1748 = vld [vmem:[%s1686 + $0x1e8] sm:$0xff]
    %v1749 = vld [vmem:[%s1686 + $0x1f0] sm:$0xff]
    %v1750 = vld [vmem:[%s1686 + $0x1f8] sm:$0xff]
    %s1751 = scalar_lea.vmem %s18, 2
    %v1752 = vld [vmem:[%s1751] sm:$0x3]
    %v1754 = vperm.slane %v1752, 0
    %v1755 = vperm.slane %v1752, 1
    %1758 = vmatpush.msra.mxu0 %v1717
    %1759 = vmatpush.msra.mxu0 %v1715
    %1760 = vmatpush.msra.mxu0 %v1713
    %1761 = vmatpush.msra.mxu0 %v1711
    %1762 = vmatpush.msra.mxu0 %v1709
    %1763 = vmatpush.msra.mxu0 %v1707
    %1764 = vmatpush.msra.mxu0 %v1705
    %1765 = vmatpush.msra.mxu0 %v1703
    %1766 = vmatpush.msra.mxu0 %v1701
    %1767 = vmatpush.msra.mxu0 %v1699
    %1768 = vmatpush.msra.mxu0 %v1697
    %1769 = vmatpush.msra.mxu0 %v1695
    %1770 = vmatpush.msra.mxu0 %v1693
    %1771 = vmatpush.msra.mxu0 %v1691
    %1772 = vmatpush.msra.mxu0 %v1689
    %1773 = vmatpush.msra.mxu0 %v1687
    %1774 = vmatmul.f32.gmra.mxu0 %v320
    %v1775 = vpop.f32.mrf.mxu0
    %v1776 = vadd.f32 %v1754, %v1775
    %1777 = vdwg.mxu0
    %1778 = vmatpush.msra.mxu0 %v1749
    %1779 = vmatpush.msra.mxu0 %v1747
    %1780 = vmatpush.msra.mxu0 %v1745
    %1781 = vmatpush.msra.mxu0 %v1743
    %1782 = vmatpush.msra.mxu0 %v1741
    %1783 = vmatpush.msra.mxu0 %v1739
    %1784 = vmatpush.msra.mxu0 %v1737
    %1785 = vmatpush.msra.mxu0 %v1735
    %1786 = vmatpush.msra.mxu0 %v1733
    %1787 = vmatpush.msra.mxu0 %v1731
    %1788 = vmatpush.msra.mxu0 %v1729
    %1789 = vmatpush.msra.mxu0 %v1727
    %1790 = vmatpush.msra.mxu0 %v1725
    %1791 = vmatpush.msra.mxu0 %v1723
    %1792 = vmatpush.msra.mxu0 %v1721
    %1793 = vmatpush.msra.mxu0 %v1719
    %1794 = vmatmul.f32.gmra.mxu0 %v321
    %v1795 = vpop.f32.mrf.mxu0
    %v1796 = vadd.f32 %v1776, %v1795
    %1797 = vdwg.mxu0
    %1798 = vmatpush.msra.mxu0 %v1718
    %1799 = vmatpush.msra.mxu0 %v1716
    %1800 = vmatpush.msra.mxu0 %v1714
    %1801 = vmatpush.msra.mxu0 %v1712
    %1802 = vmatpush.msra.mxu0 %v1710
    %1803 = vmatpush.msra.mxu0 %v1708
    %1804 = vmatpush.msra.mxu0 %v1706
    %1805 = vmatpush.msra.mxu0 %v1704
    %1806 = vmatpush.msra.mxu0 %v1702
    %1807 = vmatpush.msra.mxu0 %v1700
    %1808 = vmatpush.msra.mxu0 %v1698
    %1809 = vmatpush.msra.mxu0 %v1696
    %1810 = vmatpush.msra.mxu0 %v1694
    %1811 = vmatpush.msra.mxu0 %v1692
    %1812 = vmatpush.msra.mxu0 %v1690
    %1813 = vmatpush.msra.mxu0 %v1688
    %1814 = vmatmul.f32.gmra.mxu0 %v320
    %v1815 = vpop.f32.mrf.mxu0
    %v1816 = vadd.f32 %v1755, %v1815
    %1817 = vdwg.mxu0
    %1818 = vmatpush.msra.mxu0 %v1750
    %1819 = vmatpush.msra.mxu0 %v1748
    %1820 = vmatpush.msra.mxu0 %v1746
    %1821 = vmatpush.msra.mxu0 %v1744
    %1822 = vmatpush.msra.mxu0 %v1742
    %1823 = vmatpush.msra.mxu0 %v1740
    %1824 = vmatpush.msra.mxu0 %v1738
    %1825 = vmatpush.msra.mxu0 %v1736
    %1826 = vmatpush.msra.mxu0 %v1734
    %1827 = vmatpush.msra.mxu0 %v1732
    %1828 = vmatpush.msra.mxu0 %v1730
    %1829 = vmatpush.msra.mxu0 %v1728
    %1830 = vmatpush.msra.mxu0 %v1726
    %1831 = vmatpush.msra.mxu0 %v1724
    %1832 = vmatpush.msra.mxu0 %v1722
    %1833 = vmatpush.msra.mxu0 %v1720
    %1834 = vmatmul.f32.gmra.mxu0 %v321
    %v1835 = vpop.f32.mrf.mxu0
    %v1836 = vadd.f32 %v1816, %v1835
    %1837 = vdwg.mxu0
    %v1838 = vmax.f32 %v1796, 0.0
    %v1839 = vmax.f32 %v1836, 0.0
    %v1840 = vmul.f32 %v1530, %v1684
    %v1841 = vmul.f32 %v1531, %v1685
    %v1842 = vmul.f32 %v1840, %v1838
    %v1843 = vmul.f32 %v1841, %v1839
    %v1844 = vadd.f32 %v1376, %v1842
    %v1845 = vadd.f32 %v1377, %v1843
    %v1846 = vmax.f32 %v1844, 0.0
    %v1847 = vmax.f32 %v1845, 0.0
    %1848 = vst [vmem:[#allocation13] sm:$0xff] %v538
    %1849 = vst [vmem:[#allocation13 + $0x8] sm:$0xff] %v618
    %1850 = vst [vmem:[#allocation14] sm:$0xff] %v836
    %1851 = vst [vmem:[#allocation14 + $0x8] sm:$0xff] %v916
    %1852 = vst [vmem:[#allocation16] sm:$0xff] %v320
    %1853 = vst [vmem:[#allocation16 + $0x8] sm:$0xff] %v321
    %1854 = vst [vmem:[#allocation17] sm:$0xff] %v1846
    %1855 = vst [vmem:[#allocation17 + $0x8] sm:$0xff] %v1847
    // Predicated region
    $region102: #{tpu_custom_call.1} parent=1 // pred_check
      _
    $region103: #{tpu_custom_call.1} parent=1 // pred_check_branch
      %1857 = sbr.rel (0) target = $region105
    $region104: #{tpu_custom_call.1} parent=1 // pred_region
      %1859 = vsyncadd [#allocation4], 0
      %s1861 = sshll.u32 [#allocation13], 4
      %s1862 = int_to_ptr.vmem [resolvable:$true] %s1861
      %s1863 = sshll.u32 %s19, 4
      %s1864 = int_to_ptr.hbm [resolvable:$true] %s1863
      %1866 = dma.vmem_to_hbm [thread:$0]  %s1862, 256, %s1864, [#allocation4]
    $region105: #{tpu_custom_call.1} parent=1 // pred_fallthru
      _
    // Predicated region
    $region106: #{tpu_custom_call.1} parent=1 // pred_check
      _
    $region107: #{tpu_custom_call.1} parent=1 // pred_check_branch
      %1868 = sbr.rel (0) target = $region109
    $region108: #{tpu_custom_call.1} parent=1 // pred_region
      %1870 = vsyncadd [#allocation15], 0
      %s1872 = sshll.u32 [#allocation14], 4
      %s1873 = int_to_ptr.vmem [resolvable:$true] %s1872
      %s1874 = sshll.u32 %s20, 4
      %s1875 = int_to_ptr.hbm [resolvable:$true] %s1874
      %1877 = dma.vmem_to_hbm [thread:$0]  %s1873, 256, %s1875, [#allocation15]
    $region109: #{tpu_custom_call.1} parent=1 // pred_fallthru
      _
    // Predicated region
    $region110: #{tpu_custom_call.1} parent=1 // pred_check
      _
    $region111: #{tpu_custom_call.1} parent=1 // pred_check_branch
      %1879 = sbr.rel (0) target = $region113
    $region112: #{tpu_custom_call.1} parent=1 // pred_region
      %1881 = vsyncadd [#allocation15], 0
      %s1883 = sshll.u32 [#allocation16], 4
      %s1884 = int_to_ptr.vmem [resolvable:$true] %s1883
      %s1885 = sshll.u32 %s21, 4
      %s1886 = int_to_ptr.hbm [resolvable:$true] %s1885
      %1888 = dma.vmem_to_hbm [thread:$0]  %s1884, 256, %s1886, [#allocation15]
    $region113: #{tpu_custom_call.1} parent=1 // pred_fallthru
      _
    // Predicated region
    $region114: #{tpu_custom_call.1} parent=1 // pred_check
      _
    $region115: #{tpu_custom_call.1} parent=1 // pred_check_branch
      %1890 = sbr.rel (0) target = $region117
    $region116: #{tpu_custom_call.1} parent=1 // pred_region
      %1892 = vsyncadd [#allocation18], 0
      %s1894 = sshll.u32 [#allocation17], 4
      %s1895 = int_to_ptr.vmem [resolvable:$true] %s1894
      %s1896 = sshll.u32 %s22, 4
      %s1897 = int_to_ptr.hbm [resolvable:$true] %s1896
      %1899 = dma.vmem_to_hbm [thread:$0]  %s1895, 256, %s1897, [#allocation18]
    $region117: #{tpu_custom_call.1} parent=1 // pred_fallthru
      _
    // Predicated region
    $region118: #{tpu_custom_call.1} parent=1 // pred_check
      _
    $region119: #{tpu_custom_call.1} parent=1 // pred_check_branch
      %1901 = sbr.rel (0) target = $region121
    $region120: #{tpu_custom_call.1} parent=1 // pred_region
      %1903 = dma.done [#allocation4], 256
    $region121: #{tpu_custom_call.1} parent=1 // pred_fallthru
      _
    // Predicated region
    $region122: #{tpu_custom_call.1} parent=1 // pred_check
      _
    $region123: #{tpu_custom_call.1} parent=1 // pred_check_branch
      %1905 = sbr.rel (0) target = $region125
    $region124: #{tpu_custom_call.1} parent=1 // pred_region
      %1907 = dma.done [#allocation15], 256
    $region125: #{tpu_custom_call.1} parent=1 // pred_fallthru
      _
    // Predicated region
    $region126: #{tpu_custom_call.1} parent=1 // pred_check
      _
    $region127: #{tpu_custom_call.1} parent=1 // pred_check_branch
      %1909 = sbr.rel (0) target = $region129
    $region128: #{tpu_custom_call.1} parent=1 // pred_region
      %1911 = dma.done [#allocation15], 256
    $region129: #{tpu_custom_call.1} parent=1 // pred_fallthru
      _
    // Predicated region
    $region130: #{tpu_custom_call.1} parent=1 // pred_check
      _
    $region131: #{tpu_custom_call.1} parent=1 // pred_check_branch
      %1913 = sbr.rel (0) target = $region133
    $region132: #{tpu_custom_call.1} parent=1 // pred_region
      %1915 = dma.done [#allocation18], 256
    $region133: #{tpu_custom_call.1} parent=1 // pred_fallthru
      _
    %1916 = vsyncpa [#allocation3], 1
    %1917 = vsyncpa [#allocation6], 1
    %1918 = vsyncpa [#allocation9], 1
    %1919 = vsyncpa [#allocation12], 1
    %1920 = vsyncpa [#allocation4], 1
    %1921 = vsyncpa [#allocation15], 1
    %1922 = vsyncpa [#allocation18], 1

</llo_original>
